<compile_context>
chip_gen: v5e
topology: v5e:2x2
jax: 0.10.0
libtpu: 0.0.40
codegen_flags: <defaults>
</compile_context>

<pallas_src>
import jax
import jax.numpy as jnp
from jax import lax
from jax.experimental import pallas as pl
from jax.experimental.pallas import tpu as pltpu


def _sigmoid(x):
    # Plain exp-based sigmoid: lowers to EUP exp + divide on all TPU gens.
    return 1.0 / (1.0 + jnp.exp(-x))


def encoder_fwd_kernel(src_ref, emb_ref, wih_ref, whh_ref, b_ref,
                       out_ref, hid_ref, cell_ref):
    # src_ref : (Bt, S) int32      token ids for this batch tile
    # emb_ref : (V, E)             embedding table
    # wih_ref : (E, 4H)            W_ih^T (PyTorch W_ih is (4H, E))
    # whh_ref : (H, 4H)            W_hh^T (PyTorch W_hh is (4H, H))
    # b_ref   : (1, 4H)            b_ih + b_hh
    # out_ref : (Bt, S, H)         LSTM outputs (all h_t)
    # hid_ref : (Bt, H)            final h
    # cell_ref: (Bt, H)            final c
    Bt, S = src_ref.shape
    V, E = emb_ref.shape
    H4 = wih_ref.shape[1]
    H = H4 // 4

    # ---- Embedding lookup as one-hot matmul (exact: one 1.0 per row) --------
    src = src_ref[...]                                           # (Bt, S) int32
    iota_v = lax.broadcasted_iota(jnp.int32, (Bt, S, V), 2)
    onehot = (iota_v == src[:, :, None]).astype(jnp.float32)     # (Bt, S, V)
    onehot2 = onehot.reshape(Bt * S, V)                          # collapse majors
    embedded = jnp.dot(onehot2, emb_ref[...],
                       preferred_element_type=jnp.float32)       # (Bt*S, E)

    # ---- Input projection for every timestep in one lane-dense matmul -------
    x_proj = jnp.dot(embedded, wih_ref[...],
                     preferred_element_type=jnp.float32) + b_ref[...]  # (Bt*S, 4H)
    x_proj = x_proj.reshape(Bt, S, H4)                           # (Bt, S, 4H)

    whh = whh_ref[...]                                           # (H, 4H)
    h = jnp.zeros((Bt, H), jnp.float32)
    c = jnp.zeros((Bt, H), jnp.float32)

    # ---- Sequential recurrence (statically unrolled; S is small & static) ---
    for t in range(S):
        gates = x_proj[:, t, :] + jnp.dot(h, whh,
                                          preferred_element_type=jnp.float32)
        i_g = _sigmoid(gates[:, 0:H])
        f_g = _sigmoid(gates[:, H:2 * H])
        g_g = jnp.tanh(gates[:, 2 * H:3 * H])
        o_g = _sigmoid(gates[:, 3 * H:4 * H])
        c = f_g * c + i_g * g_g
        h = o_g * jnp.tanh(c)
        out_ref[:, t, :] = h.astype(out_ref.dtype)

    hid_ref[...] = h.astype(hid_ref.dtype)
    cell_ref[...] = c.astype(cell_ref.dtype)


def encoder_forward(src, emb_table, w_ih, w_hh, b_ih, b_hh):
    """src: (B, S) int32 token ids.  Returns (outputs, hidden, cell) like PyTorch."""
    B, S = src.shape
    V, E = emb_table.shape
    H4 = w_ih.shape[0]
    H = H4 // 4

    # Batch tile: full batch if small, else a sublane-friendly multiple of 8.
    block_b = B if B <= 8 else 8
    if B % block_b != 0:
        block_b = B
    grid = (B // block_b,)

    wih_t = w_ih.T                       # (E, 4H)
    whh_t = w_hh.T                       # (H, 4H)
    bias = (b_ih + b_hh).reshape(1, H4)  # (1, 4H)

    flops = 2 * B * S * (V * E + E * H4 + H * H4)
    bytes_accessed = 4 * (B * S + V * E + E * H4 + H * H4 + H4
                          + B * S * H + 2 * B * H)
    transcendentals = 5 * B * S * H      # 3 sigmoids + 2 tanh per hidden unit/step

    outputs, hidden, cell = pl.pallas_call(
        encoder_fwd_kernel,
        out_shape=(
            jax.ShapeDtypeStruct((B, S, H), jnp.float32),
            jax.ShapeDtypeStruct((B, H), jnp.float32),
            jax.ShapeDtypeStruct((B, H), jnp.float32),
        ),
        grid=grid,
        in_specs=[
            pl.BlockSpec((block_b, S), lambda i: (i, 0)),   # src ids
            pl.BlockSpec((V, E), lambda i: (0, 0)),         # embedding table
            pl.BlockSpec((E, H4), lambda i: (0, 0)),        # W_ih^T
            pl.BlockSpec((H, H4), lambda i: (0, 0)),        # W_hh^T
            pl.BlockSpec((1, H4), lambda i: (0, 0)),        # bias
        ],
        out_specs=(
            pl.BlockSpec((block_b, S, H), lambda i: (i, 0, 0)),
            pl.BlockSpec((block_b, H), lambda i: (i, 0)),
            pl.BlockSpec((block_b, H), lambda i: (i, 0)),
        ),
        compiler_params=pltpu.CompilerParams(
            dimension_semantics=("parallel",),
            vmem_limit_bytes=32 * 1024 * 1024,
        ),
        cost_estimate=pl.CostEstimate(
            flops=flops,
            transcendentals=transcendentals,
            bytes_accessed=bytes_accessed,
        ),
    )(src, emb_table, wih_t, whh_t, bias)

    # PyTorch returns hidden/cell with a leading (num_layers * num_directions,) dim.
    return outputs, hidden[None], cell[None]


def reference_forward(src, emb_table, w_ih, w_hh, b_ih, b_hh):
    """Pure-JAX reference matching PyTorch nn.Embedding + nn.LSTM semantics."""
    B, S = src.shape
    H = w_hh.shape[1]
    emb = emb_table[src]                                   # (B, S, E)
    h = jnp.zeros((B, H), jnp.float32)
    c = jnp.zeros((B, H), jnp.float32)
    outs = []
    for t in range(S):
        gates = emb[:, t, :] @ w_ih.T + b_ih + h @ w_hh.T + b_hh
        i_g = _sigmoid(gates[:, 0:H])
        f_g = _sigmoid(gates[:, H:2 * H])
        g_g = jnp.tanh(gates[:, 2 * H:3 * H])
        o_g = _sigmoid(gates[:, 3 * H:4 * H])
        c = f_g * c + i_g * g_g
        h = o_g * jnp.tanh(c)
        outs.append(h)
    outputs = jnp.stack(outs, axis=1)                      # (B, S, H)
    return outputs, h[None], c[None]


if __name__ == "__main__":
    key = jax.random.PRNGKey(0)
    k_src, k_emb, k_wih, k_whh, k_bih, k_bhh = jax.random.split(key, 6)

    vocab_size, emb_size, hidden_size = 32, 16, 32
    batch, seq = 2, 8

    bound = 1.0 / (hidden_size ** 0.5)
    emb_table = jax.random.normal(k_emb, (vocab_size, emb_size), jnp.float32)
    w_ih = jax.random.uniform(k_wih, (4 * hidden_size, emb_size), jnp.float32,
                              -bound, bound)
    w_hh = jax.random.uniform(k_whh, (4 * hidden_size, hidden_size), jnp.float32,
                              -bound, bound)
    b_ih = jax.random.uniform(k_bih, (4 * hidden_size,), jnp.float32, -bound, bound)
    b_hh = jax.random.uniform(k_bhh, (4 * hidden_size,), jnp.float32, -bound, bound)

    src = jax.random.randint(k_src, (batch, seq), 0, vocab_size, jnp.int32)

    outputs, hidden, cell = encoder_forward(src, emb_table, w_ih, w_hh, b_ih, b_hh)
    outputs = jax.block_until_ready(outputs)
    hidden = jax.block_until_ready(hidden)
    cell = jax.block_until_ready(cell)

    ref_out, ref_h, ref_c = reference_forward(src, emb_table, w_ih, w_hh, b_ih, b_hh)

    assert outputs.shape == (batch, seq, hidden_size)
    assert hidden.shape == (1, batch, hidden_size)
    assert cell.shape == (1, batch, hidden_size)
    assert jnp.allclose(outputs, ref_out, atol=1e-3, rtol=1e-3), "outputs mismatch"
    assert jnp.allclose(hidden, ref_h, atol=1e-3, rtol=1e-3), "hidden mismatch"
    assert jnp.allclose(cell, ref_c, atol=1e-3, rtol=1e-3), "cell mismatch"

    print("KERNEL_OK")
</pallas_src>

<mosaic_0001>
module attributes {stable_mosaic.version = 11 : i64} {
  func.func @encoder_fwd_kernel(%arg0: i32, %arg1: memref<2x8xi32, #tpu.memory_space<vmem>>, %arg2: memref<32x16xf32, #tpu.memory_space<vmem>>, %arg3: memref<16x128xf32, #tpu.memory_space<vmem>>, %arg4: memref<32x128xf32, #tpu.memory_space<vmem>>, %arg5: memref<1x128xf32, #tpu.memory_space<vmem>>, %arg6: memref<2x8x32xf32, #tpu.memory_space<vmem>>, %arg7: memref<2x32xf32, #tpu.memory_space<vmem>>, %arg8: memref<2x32xf32, #tpu.memory_space<vmem>>) attributes {dimension_semantics = [#tpu.dimension_semantics<parallel>], iteration_bounds = array<i64: 1>, scalar_prefetch = 0 : i64, scratch_operands = 0 : i64, tpu.core_type = #tpu.core_type<tc>, window_params = [{transform_indices = @transform_0, window_bounds = array<i64: 2, 8>}, {pipeline_mode = #tpu.pipeline_mode<synchronous>, transform_indices = @transform_1, window_bounds = array<i64: 32, 16>}, {pipeline_mode = #tpu.pipeline_mode<synchronous>, transform_indices = @transform_2, window_bounds = array<i64: 16, 128>}, {pipeline_mode = #tpu.pipeline_mode<synchronous>, transform_indices = @transform_3, window_bounds = array<i64: 32, 128>}, {pipeline_mode = #tpu.pipeline_mode<synchronous>, transform_indices = @transform_4, window_bounds = array<i64: 1, 128>}, {transform_indices = @transform_5, window_bounds = array<i64: 2, 8, 32>}, {transform_indices = @transform_6, window_bounds = array<i64: 2, 32>}, {transform_indices = @transform_7, window_bounds = array<i64: 2, 32>}]} {
    %c0 = arith.constant 0 : index
    %c0_0 = arith.constant 0 : index
    %0 = vector.load %arg1[%c0, %c0_0] : memref<2x8xi32, #tpu.memory_space<vmem>>, vector<2x8xi32>
    %1 = tpu.iota {dimensions = array<i32: 2>} : vector<2x8x32xi32>
    %2 = vector.shape_cast %0 : vector<2x8xi32> to vector<2x8x1xi32>
    %3 = vector.broadcast %2 : vector<2x8x1xi32> to vector<2x8x32xi32>
    %4 = arith.cmpi eq, %1, %3 : vector<2x8x32xi32>
    %5 = arith.extui %4 : vector<2x8x32xi1> to vector<2x8x32xi32>
    %6 = arith.sitofp %5 : vector<2x8x32xi32> to vector<2x8x32xf32>
    %7 = vector.shape_cast %6 : vector<2x8x32xf32> to vector<16x32xf32>
    %c0_1 = arith.constant 0 : index
    %c0_2 = arith.constant 0 : index
    %8 = vector.load %arg2[%c0_1, %c0_2] : memref<32x16xf32, #tpu.memory_space<vmem>>, vector<32x16xf32>
    %cst = arith.constant dense<0.000000e+00> : vector<16x16xf32>
    %9 = tpu.matmul %7, %8, %cst {dimension_numbers = #tpu.dot_dimension_numbers<[1], [0], [0], [1], [0, 0, 1, 1], [], []>} : vector<16x32xf32>, vector<32x16xf32>, vector<16x16xf32> -> vector<16x16xf32>
    %c0_3 = arith.constant 0 : index
    %c0_4 = arith.constant 0 : index
    %10 = vector.load %arg3[%c0_3, %c0_4] : memref<16x128xf32, #tpu.memory_space<vmem>>, vector<16x128xf32>
    %cst_5 = arith.constant dense<0.000000e+00> : vector<16x128xf32>
    %11 = tpu.matmul %9, %10, %cst_5 {dimension_numbers = #tpu.dot_dimension_numbers<[1], [0], [0], [1], [0, 0, 1, 1], [], []>} : vector<16x16xf32>, vector<16x128xf32>, vector<16x128xf32> -> vector<16x128xf32>
    %c0_6 = arith.constant 0 : index
    %c0_7 = arith.constant 0 : index
    %12 = vector.load %arg5[%c0_6, %c0_7] : memref<1x128xf32, #tpu.memory_space<vmem>>, vector<1x128xf32>
    %13 = vector.broadcast %12 : vector<1x128xf32> to vector<16x128xf32>
    %14 = arith.addf %11, %13 : vector<16x128xf32>
    %15 = vector.shape_cast %14 : vector<16x128xf32> to vector<2x8x128xf32>
    %c0_8 = arith.constant 0 : index
    %c0_9 = arith.constant 0 : index
    %16 = vector.load %arg4[%c0_8, %c0_9] : memref<32x128xf32, #tpu.memory_space<vmem>>, vector<32x128xf32>
    %cst_10 = arith.constant 0.000000e+00 : f32
    %17 = vector.broadcast %cst_10 : f32 to vector<2x32xf32>
    %cst_11 = arith.constant 0.000000e+00 : f32
    %18 = vector.broadcast %cst_11 : f32 to vector<2x32xf32>
    %19 = vector.extract_strided_slice %15 {offsets = [0, 0, 0], sizes = [2, 1, 128], strides = [1, 1, 1]} : vector<2x8x128xf32> to vector<2x1x128xf32>
    %20 = vector.shape_cast %19 : vector<2x1x128xf32> to vector<2x128xf32>
    %cst_12 = arith.constant dense<0.000000e+00> : vector<2x128xf32>
    %21 = tpu.matmul %17, %16, %cst_12 {dimension_numbers = #tpu.dot_dimension_numbers<[1], [0], [0], [1], [0, 0, 1, 1], [], []>} : vector<2x32xf32>, vector<32x128xf32>, vector<2x128xf32> -> vector<2x128xf32>
    %22 = arith.addf %20, %21 : vector<2x128xf32>
    %23 = vector.extract_strided_slice %22 {offsets = [0, 0], sizes = [2, 32], strides = [1, 1]} : vector<2x128xf32> to vector<2x32xf32>
    %cst_13 = arith.constant 0.000000e+00 : f32
    %24 = vector.broadcast %cst_13 : f32 to vector<2x32xf32>
    %25 = arith.subf %24, %23 : vector<2x32xf32>
    %26 = math.exp %25 : vector<2x32xf32>
    %cst_14 = arith.constant 1.000000e+00 : f32
    %27 = vector.broadcast %cst_14 : f32 to vector<2x32xf32>
    %28 = arith.addf %27, %26 : vector<2x32xf32>
    %cst_15 = arith.constant 1.000000e+00 : f32
    %29 = vector.broadcast %cst_15 : f32 to vector<2x32xf32>
    %30 = arith.divf %29, %28 : vector<2x32xf32>
    %31 = vector.extract_strided_slice %22 {offsets = [0, 32], sizes = [2, 32], strides = [1, 1]} : vector<2x128xf32> to vector<2x32xf32>
    %cst_16 = arith.constant 0.000000e+00 : f32
    %32 = vector.broadcast %cst_16 : f32 to vector<2x32xf32>
    %33 = arith.subf %32, %31 : vector<2x32xf32>
    %34 = math.exp %33 : vector<2x32xf32>
    %cst_17 = arith.constant 1.000000e+00 : f32
    %35 = vector.broadcast %cst_17 : f32 to vector<2x32xf32>
    %36 = arith.addf %35, %34 : vector<2x32xf32>
    %cst_18 = arith.constant 1.000000e+00 : f32
    %37 = vector.broadcast %cst_18 : f32 to vector<2x32xf32>
    %38 = arith.divf %37, %36 : vector<2x32xf32>
    %39 = vector.extract_strided_slice %22 {offsets = [0, 64], sizes = [2, 32], strides = [1, 1]} : vector<2x128xf32> to vector<2x32xf32>
    %40 = math.tanh %39 : vector<2x32xf32>
    %41 = vector.extract_strided_slice %22 {offsets = [0, 96], sizes = [2, 32], strides = [1, 1]} : vector<2x128xf32> to vector<2x32xf32>
    %cst_19 = arith.constant 0.000000e+00 : f32
    %42 = vector.broadcast %cst_19 : f32 to vector<2x32xf32>
    %43 = arith.subf %42, %41 : vector<2x32xf32>
    %44 = math.exp %43 : vector<2x32xf32>
    %cst_20 = arith.constant 1.000000e+00 : f32
    %45 = vector.broadcast %cst_20 : f32 to vector<2x32xf32>
    %46 = arith.addf %45, %44 : vector<2x32xf32>
    %cst_21 = arith.constant 1.000000e+00 : f32
    %47 = vector.broadcast %cst_21 : f32 to vector<2x32xf32>
    %48 = arith.divf %47, %46 : vector<2x32xf32>
    %49 = arith.mulf %38, %18 : vector<2x32xf32>
    %50 = arith.mulf %30, %40 : vector<2x32xf32>
    %51 = arith.addf %49, %50 : vector<2x32xf32>
    %52 = math.tanh %51 : vector<2x32xf32>
    %53 = arith.mulf %48, %52 : vector<2x32xf32>
    %c0_22 = arith.constant 0 : index
    %c0_23 = arith.constant 0 : index
    %c0_24 = arith.constant 0 : index
    %54 = vector.load %arg6[%c0_22, %c0_23, %c0_24] : memref<2x8x32xf32, #tpu.memory_space<vmem>>, vector<2x1x32xf32>
    %55 = vector.shape_cast %54 : vector<2x1x32xf32> to vector<2x32xf32>
    %56 = vector.shape_cast %53 : vector<2x32xf32> to vector<2x1x32xf32>
    tpu.vector_store %arg6[%c0_22, %c0_23, %c0_24], %56 {strides = array<i32>} : memref<2x8x32xf32, #tpu.memory_space<vmem>>, vector<2x1x32xf32>,
    %57 = vector.extract_strided_slice %15 {offsets = [0, 1, 0], sizes = [2, 1, 128], strides = [1, 1, 1]} : vector<2x8x128xf32> to vector<2x1x128xf32>
    %58 = vector.shape_cast %57 : vector<2x1x128xf32> to vector<2x128xf32>
    %cst_25 = arith.constant dense<0.000000e+00> : vector<2x128xf32>
    %59 = tpu.matmul %53, %16, %cst_25 {dimension_numbers = #tpu.dot_dimension_numbers<[1], [0], [0], [1], [0, 0, 1, 1], [], []>} : vector<2x32xf32>, vector<32x128xf32>, vector<2x128xf32> -> vector<2x128xf32>
    %60 = arith.addf %58, %59 : vector<2x128xf32>
    %61 = vector.extract_strided_slice %60 {offsets = [0, 0], sizes = [2, 32], strides = [1, 1]} : vector<2x128xf32> to vector<2x32xf32>
    %cst_26 = arith.constant 0.000000e+00 : f32
    %62 = vector.broadcast %cst_26 : f32 to vector<2x32xf32>
    %63 = arith.subf %62, %61 : vector<2x32xf32>
    %64 = math.exp %63 : vector<2x32xf32>
    %cst_27 = arith.constant 1.000000e+00 : f32
    %65 = vector.broadcast %cst_27 : f32 to vector<2x32xf32>
    %66 = arith.addf %65, %64 : vector<2x32xf32>
    %cst_28 = arith.constant 1.000000e+00 : f32
    %67 = vector.broadcast %cst_28 : f32 to vector<2x32xf32>
    %68 = arith.divf %67, %66 : vector<2x32xf32>
    %69 = vector.extract_strided_slice %60 {offsets = [0, 32], sizes = [2, 32], strides = [1, 1]} : vector<2x128xf32> to vector<2x32xf32>
    %cst_29 = arith.constant 0.000000e+00 : f32
    %70 = vector.broadcast %cst_29 : f32 to vector<2x32xf32>
    %71 = arith.subf %70, %69 : vector<2x32xf32>
    %72 = math.exp %71 : vector<2x32xf32>
    %cst_30 = arith.constant 1.000000e+00 : f32
    %73 = vector.broadcast %cst_30 : f32 to vector<2x32xf32>
    %74 = arith.addf %73, %72 : vector<2x32xf32>
    %cst_31 = arith.constant 1.000000e+00 : f32
    %75 = vector.broadcast %cst_31 : f32 to vector<2x32xf32>
    %76 = arith.divf %75, %74 : vector<2x32xf32>
    %77 = vector.extract_strided_slice %60 {offsets = [0, 64], sizes = [2, 32], strides = [1, 1]} : vector<2x128xf32> to vector<2x32xf32>
    %78 = math.tanh %77 : vector<2x32xf32>
    %79 = vector.extract_strided_slice %60 {offsets = [0, 96], sizes = [2, 32], strides = [1, 1]} : vector<2x128xf32> to vector<2x32xf32>
    %cst_32 = arith.constant 0.000000e+00 : f32
    %80 = vector.broadcast %cst_32 : f32 to vector<2x32xf32>
    %81 = arith.subf %80, %79 : vector<2x32xf32>
    %82 = math.exp %81 : vector<2x32xf32>
    %cst_33 = arith.constant 1.000000e+00 : f32
    %83 = vector.broadcast %cst_33 : f32 to vector<2x32xf32>
    %84 = arith.addf %83, %82 : vector<2x32xf32>
    %cst_34 = arith.constant 1.000000e+00 : f32
    %85 = vector.broadcast %cst_34 : f32 to vector<2x32xf32>
    %86 = arith.divf %85, %84 : vector<2x32xf32>
    %87 = arith.mulf %76, %51 : vector<2x32xf32>
    %88 = arith.mulf %68, %78 : vector<2x32xf32>
    %89 = arith.addf %87, %88 : vector<2x32xf32>
    %90 = math.tanh %89 : vector<2x32xf32>
    %91 = arith.mulf %86, %90 : vector<2x32xf32>
    %c0_35 = arith.constant 0 : index
    %c1 = arith.constant 1 : index
    %c0_36 = arith.constant 0 : index
    %92 = vector.load %arg6[%c0_35, %c1, %c0_36] : memref<2x8x32xf32, #tpu.memory_space<vmem>>, vector<2x1x32xf32>
    %93 = vector.shape_cast %92 : vector<2x1x32xf32> to vector<2x32xf32>
    %94 = vector.shape_cast %91 : vector<2x32xf32> to vector<2x1x32xf32>
    tpu.vector_store %arg6[%c0_35, %c1, %c0_36], %94 {strides = array<i32>} : memref<2x8x32xf32, #tpu.memory_space<vmem>>, vector<2x1x32xf32>,
    %95 = vector.extract_strided_slice %15 {offsets = [0, 2, 0], sizes = [2, 1, 128], strides = [1, 1, 1]} : vector<2x8x128xf32> to vector<2x1x128xf32>
    %96 = vector.shape_cast %95 : vector<2x1x128xf32> to vector<2x128xf32>
    %cst_37 = arith.constant dense<0.000000e+00> : vector<2x128xf32>
    %97 = tpu.matmul %91, %16, %cst_37 {dimension_numbers = #tpu.dot_dimension_numbers<[1], [0], [0], [1], [0, 0, 1, 1], [], []>} : vector<2x32xf32>, vector<32x128xf32>, vector<2x128xf32> -> vector<2x128xf32>
    %98 = arith.addf %96, %97 : vector<2x128xf32>
    %99 = vector.extract_strided_slice %98 {offsets = [0, 0], sizes = [2, 32], strides = [1, 1]} : vector<2x128xf32> to vector<2x32xf32>
    %cst_38 = arith.constant 0.000000e+00 : f32
    %100 = vector.broadcast %cst_38 : f32 to vector<2x32xf32>
    %101 = arith.subf %100, %99 : vector<2x32xf32>
    %102 = math.exp %101 : vector<2x32xf32>
    %cst_39 = arith.constant 1.000000e+00 : f32
    %103 = vector.broadcast %cst_39 : f32 to vector<2x32xf32>
    %104 = arith.addf %103, %102 : vector<2x32xf32>
    %cst_40 = arith.constant 1.000000e+00 : f32
    %105 = vector.broadcast %cst_40 : f32 to vector<2x32xf32>
    %106 = arith.divf %105, %104 : vector<2x32xf32>
    %107 = vector.extract_strided_slice %98 {offsets = [0, 32], sizes = [2, 32], strides = [1, 1]} : vector<2x128xf32> to vector<2x32xf32>
    %cst_41 = arith.constant 0.000000e+00 : f32
    %108 = vector.broadcast %cst_41 : f32 to vector<2x32xf32>
    %109 = arith.subf %108, %107 : vector<2x32xf32>
    %110 = math.exp %109 : vector<2x32xf32>
    %cst_42 = arith.constant 1.000000e+00 : f32
    %111 = vector.broadcast %cst_42 : f32 to vector<2x32xf32>
    %112 = arith.addf %111, %110 : vector<2x32xf32>
    %cst_43 = arith.constant 1.000000e+00 : f32
    %113 = vector.broadcast %cst_43 : f32 to vector<2x32xf32>
    %114 = arith.divf %113, %112 : vector<2x32xf32>
    %115 = vector.extract_strided_slice %98 {offsets = [0, 64], sizes = [2, 32], strides = [1, 1]} : vector<2x128xf32> to vector<2x32xf32>
    %116 = math.tanh %115 : vector<2x32xf32>
    %117 = vector.extract_strided_slice %98 {offsets = [0, 96], sizes = [2, 32], strides = [1, 1]} : vector<2x128xf32> to vector<2x32xf32>
    %cst_44 = arith.constant 0.000000e+00 : f32
    %118 = vector.broadcast %cst_44 : f32 to vector<2x32xf32>
    %119 = arith.subf %118, %117 : vector<2x32xf32>
    %120 = math.exp %119 : vector<2x32xf32>
    %cst_45 = arith.constant 1.000000e+00 : f32
    %121 = vector.broadcast %cst_45 : f32 to vector<2x32xf32>
    %122 = arith.addf %121, %120 : vector<2x32xf32>
    %cst_46 = arith.constant 1.000000e+00 : f32
    %123 = vector.broadcast %cst_46 : f32 to vector<2x32xf32>
    %124 = arith.divf %123, %122 : vector<2x32xf32>
    %125 = arith.mulf %114, %89 : vector<2x32xf32>
    %126 = arith.mulf %106, %116 : vector<2x32xf32>
    %127 = arith.addf %125, %126 : vector<2x32xf32>
    %128 = math.tanh %127 : vector<2x32xf32>
    %129 = arith.mulf %124, %128 : vector<2x32xf32>
    %c0_47 = arith.constant 0 : index
    %c2 = arith.constant 2 : index
    %c0_48 = arith.constant 0 : index
    %130 = vector.load %arg6[%c0_47, %c2, %c0_48] : memref<2x8x32xf32, #tpu.memory_space<vmem>>, vector<2x1x32xf32>
    %131 = vector.shape_cast %130 : vector<2x1x32xf32> to vector<2x32xf32>
    %132 = vector.shape_cast %129 : vector<2x32xf32> to vector<2x1x32xf32>
    tpu.vector_store %arg6[%c0_47, %c2, %c0_48], %132 {strides = array<i32>} : memref<2x8x32xf32, #tpu.memory_space<vmem>>, vector<2x1x32xf32>,
    %133 = vector.extract_strided_slice %15 {offsets = [0, 3, 0], sizes = [2, 1, 128], strides = [1, 1, 1]} : vector<2x8x128xf32> to vector<2x1x128xf32>
    %134 = vector.shape_cast %133 : vector<2x1x128xf32> to vector<2x128xf32>
    %cst_49 = arith.constant dense<0.000000e+00> : vector<2x128xf32>
    %135 = tpu.matmul %129, %16, %cst_49 {dimension_numbers = #tpu.dot_dimension_numbers<[1], [0], [0], [1], [0, 0, 1, 1], [], []>} : vector<2x32xf32>, vector<32x128xf32>, vector<2x128xf32> -> vector<2x128xf32>
    %136 = arith.addf %134, %135 : vector<2x128xf32>
    %137 = vector.extract_strided_slice %136 {offsets = [0, 0], sizes = [2, 32], strides = [1, 1]} : vector<2x128xf32> to vector<2x32xf32>
    %cst_50 = arith.constant 0.000000e+00 : f32
    %138 = vector.broadcast %cst_50 : f32 to vector<2x32xf32>
    %139 = arith.subf %138, %137 : vector<2x32xf32>
    %140 = math.exp %139 : vector<2x32xf32>
    %cst_51 = arith.constant 1.000000e+00 : f32
    %141 = vector.broadcast %cst_51 : f32 to vector<2x32xf32>
    %142 = arith.addf %141, %140 : vector<2x32xf32>
    %cst_52 = arith.constant 1.000000e+00 : f32
    %143 = vector.broadcast %cst_52 : f32 to vector<2x32xf32>
    %144 = arith.divf %143, %142 : vector<2x32xf32>
    %145 = vector.extract_strided_slice %136 {offsets = [0, 32], sizes = [2, 32], strides = [1, 1]} : vector<2x128xf32> to vector<2x32xf32>
    %cst_53 = arith.constant 0.000000e+00 : f32
    %146 = vector.broadcast %cst_53 : f32 to vector<2x32xf32>
    %147 = arith.subf %146, %145 : vector<2x32xf32>
    %148 = math.exp %147 : vector<2x32xf32>
    %cst_54 = arith.constant 1.000000e+00 : f32
    %149 = vector.broadcast %cst_54 : f32 to vector<2x32xf32>
    %150 = arith.addf %149, %148 : vector<2x32xf32>
    %cst_55 = arith.constant 1.000000e+00 : f32
    %151 = vector.broadcast %cst_55 : f32 to vector<2x32xf32>
    %152 = arith.divf %151, %150 : vector<2x32xf32>
    %153 = vector.extract_strided_slice %136 {offsets = [0, 64], sizes = [2, 32], strides = [1, 1]} : vector<2x128xf32> to vector<2x32xf32>
    %154 = math.tanh %153 : vector<2x32xf32>
    %155 = vector.extract_strided_slice %136 {offsets = [0, 96], sizes = [2, 32], strides = [1, 1]} : vector<2x128xf32> to vector<2x32xf32>
    %cst_56 = arith.constant 0.000000e+00 : f32
    %156 = vector.broadcast %cst_56 : f32 to vector<2x32xf32>
    %157 = arith.subf %156, %155 : vector<2x32xf32>
    %158 = math.exp %157 : vector<2x32xf32>
    %cst_57 = arith.constant 1.000000e+00 : f32
    %159 = vector.broadcast %cst_57 : f32 to vector<2x32xf32>
    %160 = arith.addf %159, %158 : vector<2x32xf32>
    %cst_58 = arith.constant 1.000000e+00 : f32
    %161 = vector.broadcast %cst_58 : f32 to vector<2x32xf32>
    %162 = arith.divf %161, %160 : vector<2x32xf32>
    %163 = arith.mulf %152, %127 : vector<2x32xf32>
    %164 = arith.mulf %144, %154 : vector<2x32xf32>
    %165 = arith.addf %163, %164 : vector<2x32xf32>
    %166 = math.tanh %165 : vector<2x32xf32>
    %167 = arith.mulf %162, %166 : vector<2x32xf32>
    %c0_59 = arith.constant 0 : index
    %c3 = arith.constant 3 : index
    %c0_60 = arith.constant 0 : index
    %168 = vector.load %arg6[%c0_59, %c3, %c0_60] : memref<2x8x32xf32, #tpu.memory_space<vmem>>, vector<2x1x32xf32>
    %169 = vector.shape_cast %168 : vector<2x1x32xf32> to vector<2x32xf32>
    %170 = vector.shape_cast %167 : vector<2x32xf32> to vector<2x1x32xf32>
    tpu.vector_store %arg6[%c0_59, %c3, %c0_60], %170 {strides = array<i32>} : memref<2x8x32xf32, #tpu.memory_space<vmem>>, vector<2x1x32xf32>,
    %171 = vector.extract_strided_slice %15 {offsets = [0, 4, 0], sizes = [2, 1, 128], strides = [1, 1, 1]} : vector<2x8x128xf32> to vector<2x1x128xf32>
    %172 = vector.shape_cast %171 : vector<2x1x128xf32> to vector<2x128xf32>
    %cst_61 = arith.constant dense<0.000000e+00> : vector<2x128xf32>
    %173 = tpu.matmul %167, %16, %cst_61 {dimension_numbers = #tpu.dot_dimension_numbers<[1], [0], [0], [1], [0, 0, 1, 1], [], []>} : vector<2x32xf32>, vector<32x128xf32>, vector<2x128xf32> -> vector<2x128xf32>
    %174 = arith.addf %172, %173 : vector<2x128xf32>
    %175 = vector.extract_strided_slice %174 {offsets = [0, 0], sizes = [2, 32], strides = [1, 1]} : vector<2x128xf32> to vector<2x32xf32>
    %cst_62 = arith.constant 0.000000e+00 : f32
    %176 = vector.broadcast %cst_62 : f32 to vector<2x32xf32>
    %177 = arith.subf %176, %175 : vector<2x32xf32>
    %178 = math.exp %177 : vector<2x32xf32>
    %cst_63 = arith.constant 1.000000e+00 : f32
    %179 = vector.broadcast %cst_63 : f32 to vector<2x32xf32>
    %180 = arith.addf %179, %178 : vector<2x32xf32>
    %cst_64 = arith.constant 1.000000e+00 : f32
    %181 = vector.broadcast %cst_64 : f32 to vector<2x32xf32>
    %182 = arith.divf %181, %180 : vector<2x32xf32>
    %183 = vector.extract_strided_slice %174 {offsets = [0, 32], sizes = [2, 32], strides = [1, 1]} : vector<2x128xf32> to vector<2x32xf32>
    %cst_65 = arith.constant 0.000000e+00 : f32
    %184 = vector.broadcast %cst_65 : f32 to vector<2x32xf32>
    %185 = arith.subf %184, %183 : vector<2x32xf32>
    %186 = math.exp %185 : vector<2x32xf32>
    %cst_66 = arith.constant 1.000000e+00 : f32
    %187 = vector.broadcast %cst_66 : f32 to vector<2x32xf32>
    %188 = arith.addf %187, %186 : vector<2x32xf32>
    %cst_67 = arith.constant 1.000000e+00 : f32
    %189 = vector.broadcast %cst_67 : f32 to vector<2x32xf32>
    %190 = arith.divf %189, %188 : vector<2x32xf32>
    %191 = vector.extract_strided_slice %174 {offsets = [0, 64], sizes = [2, 32], strides = [1, 1]} : vector<2x128xf32> to vector<2x32xf32>
    %192 = math.tanh %191 : vector<2x32xf32>
    %193 = vector.extract_strided_slice %174 {offsets = [0, 96], sizes = [2, 32], strides = [1, 1]} : vector<2x128xf32> to vector<2x32xf32>
    %cst_68 = arith.constant 0.000000e+00 : f32
    %194 = vector.broadcast %cst_68 : f32 to vector<2x32xf32>
    %195 = arith.subf %194, %193 : vector<2x32xf32>
    %196 = math.exp %195 : vector<2x32xf32>
    %cst_69 = arith.constant 1.000000e+00 : f32
    %197 = vector.broadcast %cst_69 : f32 to vector<2x32xf32>
    %198 = arith.addf %197, %196 : vector<2x32xf32>
    %cst_70 = arith.constant 1.000000e+00 : f32
    %199 = vector.broadcast %cst_70 : f32 to vector<2x32xf32>
    %200 = arith.divf %199, %198 : vector<2x32xf32>
    %201 = arith.mulf %190, %165 : vector<2x32xf32>
    %202 = arith.mulf %182, %192 : vector<2x32xf32>
    %203 = arith.addf %201, %202 : vector<2x32xf32>
    %204 = math.tanh %203 : vector<2x32xf32>
    %205 = arith.mulf %200, %204 : vector<2x32xf32>
    %c0_71 = arith.constant 0 : index
    %c4 = arith.constant 4 : index
    %c0_72 = arith.constant 0 : index
    %206 = vector.load %arg6[%c0_71, %c4, %c0_72] : memref<2x8x32xf32, #tpu.memory_space<vmem>>, vector<2x1x32xf32>
    %207 = vector.shape_cast %206 : vector<2x1x32xf32> to vector<2x32xf32>
    %208 = vector.shape_cast %205 : vector<2x32xf32> to vector<2x1x32xf32>
    tpu.vector_store %arg6[%c0_71, %c4, %c0_72], %208 {strides = array<i32>} : memref<2x8x32xf32, #tpu.memory_space<vmem>>, vector<2x1x32xf32>,
    %209 = vector.extract_strided_slice %15 {offsets = [0, 5, 0], sizes = [2, 1, 128], strides = [1, 1, 1]} : vector<2x8x128xf32> to vector<2x1x128xf32>
    %210 = vector.shape_cast %209 : vector<2x1x128xf32> to vector<2x128xf32>
    %cst_73 = arith.constant dense<0.000000e+00> : vector<2x128xf32>
    %211 = tpu.matmul %205, %16, %cst_73 {dimension_numbers = #tpu.dot_dimension_numbers<[1], [0], [0], [1], [0, 0, 1, 1], [], []>} : vector<2x32xf32>, vector<32x128xf32>, vector<2x128xf32> -> vector<2x128xf32>
    %212 = arith.addf %210, %211 : vector<2x128xf32>
    %213 = vector.extract_strided_slice %212 {offsets = [0, 0], sizes = [2, 32], strides = [1, 1]} : vector<2x128xf32> to vector<2x32xf32>
    %cst_74 = arith.constant 0.000000e+00 : f32
    %214 = vector.broadcast %cst_74 : f32 to vector<2x32xf32>
    %215 = arith.subf %214, %213 : vector<2x32xf32>
    %216 = math.exp %215 : vector<2x32xf32>
    %cst_75 = arith.constant 1.000000e+00 : f32
    %217 = vector.broadcast %cst_75 : f32 to vector<2x32xf32>
    %218 = arith.addf %217, %216 : vector<2x32xf32>
    %cst_76 = arith.constant 1.000000e+00 : f32
    %219 = vector.broadcast %cst_76 : f32 to vector<2x32xf32>
    %220 = arith.divf %219, %218 : vector<2x32xf32>
    %221 = vector.extract_strided_slice %212 {offsets = [0, 32], sizes = [2, 32], strides = [1, 1]} : vector<2x128xf32> to vector<2x32xf32>
    %cst_77 = arith.constant 0.000000e+00 : f32
    %222 = vector.broadcast %cst_77 : f32 to vector<2x32xf32>
    %223 = arith.subf %222, %221 : vector<2x32xf32>
    %224 = math.exp %223 : vector<2x32xf32>
    %cst_78 = arith.constant 1.000000e+00 : f32
    %225 = vector.broadcast %cst_78 : f32 to vector<2x32xf32>
    %226 = arith.addf %225, %224 : vector<2x32xf32>
    %cst_79 = arith.constant 1.000000e+00 : f32
    %227 = vector.broadcast %cst_79 : f32 to vector<2x32xf32>
    %228 = arith.divf %227, %226 : vector<2x32xf32>
    %229 = vector.extract_strided_slice %212 {offsets = [0, 64], sizes = [2, 32], strides = [1, 1]} : vector<2x128xf32> to vector<2x32xf32>
    %230 = math.tanh %229 : vector<2x32xf32>
    %231 = vector.extract_strided_slice %212 {offsets = [0, 96], sizes = [2, 32], strides = [1, 1]} : vector<2x128xf32> to vector<2x32xf32>
    %cst_80 = arith.constant 0.000000e+00 : f32
    %232 = vector.broadcast %cst_80 : f32 to vector<2x32xf32>
    %233 = arith.subf %232, %231 : vector<2x32xf32>
    %234 = math.exp %233 : vector<2x32xf32>
    %cst_81 = arith.constant 1.000000e+00 : f32
    %235 = vector.broadcast %cst_81 : f32 to vector<2x32xf32>
    %236 = arith.addf %235, %234 : vector<2x32xf32>
    %cst_82 = arith.constant 1.000000e+00 : f32
    %237 = vector.broadcast %cst_82 : f32 to vector<2x32xf32>
    %238 = arith.divf %237, %236 : vector<2x32xf32>
    %239 = arith.mulf %228, %203 : vector<2x32xf32>
    %240 = arith.mulf %220, %230 : vector<2x32xf32>
    %241 = arith.addf %239, %240 : vector<2x32xf32>
    %242 = math.tanh %241 : vector<2x32xf32>
    %243 = arith.mulf %238, %242 : vector<2x32xf32>
    %c0_83 = arith.constant 0 : index
    %c5 = arith.constant 5 : index
    %c0_84 = arith.constant 0 : index
    %244 = vector.load %arg6[%c0_83, %c5, %c0_84] : memref<2x8x32xf32, #tpu.memory_space<vmem>>, vector<2x1x32xf32>
    %245 = vector.shape_cast %244 : vector<2x1x32xf32> to vector<2x32xf32>
    %246 = vector.shape_cast %243 : vector<2x32xf32> to vector<2x1x32xf32>
    tpu.vector_store %arg6[%c0_83, %c5, %c0_84], %246 {strides = array<i32>} : memref<2x8x32xf32, #tpu.memory_space<vmem>>, vector<2x1x32xf32>,
    %247 = vector.extract_strided_slice %15 {offsets = [0, 6, 0], sizes = [2, 1, 128], strides = [1, 1, 1]} : vector<2x8x128xf32> to vector<2x1x128xf32>
    %248 = vector.shape_cast %247 : vector<2x1x128xf32> to vector<2x128xf32>
    %cst_85 = arith.constant dense<0.000000e+00> : vector<2x128xf32>
    %249 = tpu.matmul %243, %16, %cst_85 {dimension_numbers = #tpu.dot_dimension_numbers<[1], [0], [0], [1], [0, 0, 1, 1], [], []>} : vector<2x32xf32>, vector<32x128xf32>, vector<2x128xf32> -> vector<2x128xf32>
    %250 = arith.addf %248, %249 : vector<2x128xf32>
    %251 = vector.extract_strided_slice %250 {offsets = [0, 0], sizes = [2, 32], strides = [1, 1]} : vector<2x128xf32> to vector<2x32xf32>
    %cst_86 = arith.constant 0.000000e+00 : f32
    %252 = vector.broadcast %cst_86 : f32 to vector<2x32xf32>
    %253 = arith.subf %252, %251 : vector<2x32xf32>
    %254 = math.exp %253 : vector<2x32xf32>
    %cst_87 = arith.constant 1.000000e+00 : f32
    %255 = vector.broadcast %cst_87 : f32 to vector<2x32xf32>
    %256 = arith.addf %255, %254 : vector<2x32xf32>
    %cst_88 = arith.constant 1.000000e+00 : f32
    %257 = vector.broadcast %cst_88 : f32 to vector<2x32xf32>
    %258 = arith.divf %257, %256 : vector<2x32xf32>
    %259 = vector.extract_strided_slice %250 {offsets = [0, 32], sizes = [2, 32], strides = [1, 1]} : vector<2x128xf32> to vector<2x32xf32>
    %cst_89 = arith.constant 0.000000e+00 : f32
    %260 = vector.broadcast %cst_89 : f32 to vector<2x32xf32>
    %261 = arith.subf %260, %259 : vector<2x32xf32>
    %262 = math.exp %261 : vector<2x32xf32>
    %cst_90 = arith.constant 1.000000e+00 : f32
    %263 = vector.broadcast %cst_90 : f32 to vector<2x32xf32>
    %264 = arith.addf %263, %262 : vector<2x32xf32>
    %cst_91 = arith.constant 1.000000e+00 : f32
    %265 = vector.broadcast %cst_91 : f32 to vector<2x32xf32>
    %266 = arith.divf %265, %264 : vector<2x32xf32>
    %267 = vector.extract_strided_slice %250 {offsets = [0, 64], sizes = [2, 32], strides = [1, 1]} : vector<2x128xf32> to vector<2x32xf32>
    %268 = math.tanh %267 : vector<2x32xf32>
    %269 = vector.extract_strided_slice %250 {offsets = [0, 96], sizes = [2, 32], strides = [1, 1]} : vector<2x128xf32> to vector<2x32xf32>
    %cst_92 = arith.constant 0.000000e+00 : f32
    %270 = vector.broadcast %cst_92 : f32 to vector<2x32xf32>
    %271 = arith.subf %270, %269 : vector<2x32xf32>
    %272 = math.exp %271 : vector<2x32xf32>
    %cst_93 = arith.constant 1.000000e+00 : f32
    %273 = vector.broadcast %cst_93 : f32 to vector<2x32xf32>
    %274 = arith.addf %273, %272 : vector<2x32xf32>
    %cst_94 = arith.constant 1.000000e+00 : f32
    %275 = vector.broadcast %cst_94 : f32 to vector<2x32xf32>
    %276 = arith.divf %275, %274 : vector<2x32xf32>
    %277 = arith.mulf %266, %241 : vector<2x32xf32>
    %278 = arith.mulf %258, %268 : vector<2x32xf32>
    %279 = arith.addf %277, %278 : vector<2x32xf32>
    %280 = math.tanh %279 : vector<2x32xf32>
    %281 = arith.mulf %276, %280 : vector<2x32xf32>
    %c0_95 = arith.constant 0 : index
    %c6 = arith.constant 6 : index
    %c0_96 = arith.constant 0 : index
    %282 = vector.load %arg6[%c0_95, %c6, %c0_96] : memref<2x8x32xf32, #tpu.memory_space<vmem>>, vector<2x1x32xf32>
    %283 = vector.shape_cast %282 : vector<2x1x32xf32> to vector<2x32xf32>
    %284 = vector.shape_cast %281 : vector<2x32xf32> to vector<2x1x32xf32>
    tpu.vector_store %arg6[%c0_95, %c6, %c0_96], %284 {strides = array<i32>} : memref<2x8x32xf32, #tpu.memory_space<vmem>>, vector<2x1x32xf32>,
    %285 = vector.extract_strided_slice %15 {offsets = [0, 7, 0], sizes = [2, 1, 128], strides = [1, 1, 1]} : vector<2x8x128xf32> to vector<2x1x128xf32>
    %286 = vector.shape_cast %285 : vector<2x1x128xf32> to vector<2x128xf32>
    %cst_97 = arith.constant dense<0.000000e+00> : vector<2x128xf32>
    %287 = tpu.matmul %281, %16, %cst_97 {dimension_numbers = #tpu.dot_dimension_numbers<[1], [0], [0], [1], [0, 0, 1, 1], [], []>} : vector<2x32xf32>, vector<32x128xf32>, vector<2x128xf32> -> vector<2x128xf32>
    %288 = arith.addf %286, %287 : vector<2x128xf32>
    %289 = vector.extract_strided_slice %288 {offsets = [0, 0], sizes = [2, 32], strides = [1, 1]} : vector<2x128xf32> to vector<2x32xf32>
    %cst_98 = arith.constant 0.000000e+00 : f32
    %290 = vector.broadcast %cst_98 : f32 to vector<2x32xf32>
    %291 = arith.subf %290, %289 : vector<2x32xf32>
    %292 = math.exp %291 : vector<2x32xf32>
    %cst_99 = arith.constant 1.000000e+00 : f32
    %293 = vector.broadcast %cst_99 : f32 to vector<2x32xf32>
    %294 = arith.addf %293, %292 : vector<2x32xf32>
    %cst_100 = arith.constant 1.000000e+00 : f32
    %295 = vector.broadcast %cst_100 : f32 to vector<2x32xf32>
    %296 = arith.divf %295, %294 : vector<2x32xf32>
    %297 = vector.extract_strided_slice %288 {offsets = [0, 32], sizes = [2, 32], strides = [1, 1]} : vector<2x128xf32> to vector<2x32xf32>
    %cst_101 = arith.constant 0.000000e+00 : f32
    %298 = vector.broadcast %cst_101 : f32 to vector<2x32xf32>
    %299 = arith.subf %298, %297 : vector<2x32xf32>
    %300 = math.exp %299 : vector<2x32xf32>
    %cst_102 = arith.constant 1.000000e+00 : f32
    %301 = vector.broadcast %cst_102 : f32 to vector<2x32xf32>
    %302 = arith.addf %301, %300 : vector<2x32xf32>
    %cst_103 = arith.constant 1.000000e+00 : f32
    %303 = vector.broadcast %cst_103 : f32 to vector<2x32xf32>
    %304 = arith.divf %303, %302 : vector<2x32xf32>
    %305 = vector.extract_strided_slice %288 {offsets = [0, 64], sizes = [2, 32], strides = [1, 1]} : vector<2x128xf32> to vector<2x32xf32>
    %306 = math.tanh %305 : vector<2x32xf32>
    %307 = vector.extract_strided_slice %288 {offsets = [0, 96], sizes = [2, 32], strides = [1, 1]} : vector<2x128xf32> to vector<2x32xf32>
    %cst_104 = arith.constant 0.000000e+00 : f32
    %308 = vector.broadcast %cst_104 : f32 to vector<2x32xf32>
    %309 = arith.subf %308, %307 : vector<2x32xf32>
    %310 = math.exp %309 : vector<2x32xf32>
    %cst_105 = arith.constant 1.000000e+00 : f32
    %311 = vector.broadcast %cst_105 : f32 to vector<2x32xf32>
    %312 = arith.addf %311, %310 : vector<2x32xf32>
    %cst_106 = arith.constant 1.000000e+00 : f32
    %313 = vector.broadcast %cst_106 : f32 to vector<2x32xf32>
    %314 = arith.divf %313, %312 : vector<2x32xf32>
    %315 = arith.mulf %304, %279 : vector<2x32xf32>
    %316 = arith.mulf %296, %306 : vector<2x32xf32>
    %317 = arith.addf %315, %316 : vector<2x32xf32>
    %318 = math.tanh %317 : vector<2x32xf32>
    %319 = arith.mulf %314, %318 : vector<2x32xf32>
    %c0_107 = arith.constant 0 : index
    %c7 = arith.constant 7 : index
    %c0_108 = arith.constant 0 : index
    %320 = vector.load %arg6[%c0_107, %c7, %c0_108] : memref<2x8x32xf32, #tpu.memory_space<vmem>>, vector<2x1x32xf32>
    %321 = vector.shape_cast %320 : vector<2x1x32xf32> to vector<2x32xf32>
    %322 = vector.shape_cast %319 : vector<2x32xf32> to vector<2x1x32xf32>
    tpu.vector_store %arg6[%c0_107, %c7, %c0_108], %322 {strides = array<i32>} : memref<2x8x32xf32, #tpu.memory_space<vmem>>, vector<2x1x32xf32>,
    %c0_109 = arith.constant 0 : index
    %c0_110 = arith.constant 0 : index
    %323 = vector.load %arg7[%c0_109, %c0_110] : memref<2x32xf32, #tpu.memory_space<vmem>>, vector<2x32xf32>
    tpu.vector_store %arg7[%c0_109, %c0_110], %319 {strides = array<i32>} : memref<2x32xf32, #tpu.memory_space<vmem>>, vector<2x32xf32>,
    %c0_111 = arith.constant 0 : index
    %c0_112 = arith.constant 0 : index
    %324 = vector.load %arg8[%c0_111, %c0_112] : memref<2x32xf32, #tpu.memory_space<vmem>>, vector<2x32xf32>
    tpu.vector_store %arg8[%c0_111, %c0_112], %317 {strides = array<i32>} : memref<2x32xf32, #tpu.memory_space<vmem>>, vector<2x32xf32>,
    return
  }
  func.func @transform_0(%arg0: i32) -> (i32, i32) {
    %c0_i32 = arith.constant 0 : i32
    %c0_i32_0 = arith.constant 0 : i32
    return %arg0, %c0_i32 : i32, i32
  }
  func.func @transform_1(%arg0: i32) -> (i32, i32) {
    %c0_i32 = arith.constant 0 : i32
    %c0_i32_0 = arith.constant 0 : i32
    %c0_i32_1 = arith.constant 0 : i32
    return %c0_i32, %c0_i32_0 : i32, i32
  }
  func.func @transform_2(%arg0: i32) -> (i32, i32) {
    %c0_i32 = arith.constant 0 : i32
    %c0_i32_0 = arith.constant 0 : i32
    %c0_i32_1 = arith.constant 0 : i32
    return %c0_i32, %c0_i32_0 : i32, i32
  }
  func.func @transform_3(%arg0: i32) -> (i32, i32) {
    %c0_i32 = arith.constant 0 : i32
    %c0_i32_0 = arith.constant 0 : i32
    %c0_i32_1 = arith.constant 0 : i32
    return %c0_i32, %c0_i32_0 : i32, i32
  }
  func.func @transform_4(%arg0: i32) -> (i32, i32) {
    %c0_i32 = arith.constant 0 : i32
    %c0_i32_0 = arith.constant 0 : i32
    %c0_i32_1 = arith.constant 0 : i32
    return %c0_i32, %c0_i32_0 : i32, i32
  }
  func.func @transform_5(%arg0: i32) -> (i32, i32, i32) {
    %c0_i32 = arith.constant 0 : i32
    %c0_i32_0 = arith.constant 0 : i32
    %c0_i32_1 = arith.constant 0 : i32
    return %arg0, %c0_i32, %c0_i32_0 : i32, i32, i32
  }
  func.func @transform_6(%arg0: i32) -> (i32, i32) {
    %c0_i32 = arith.constant 0 : i32
    %c0_i32_0 = arith.constant 0 : i32
    return %arg0, %c0_i32 : i32, i32
  }
  func.func @transform_7(%arg0: i32) -> (i32, i32) {
    %c0_i32 = arith.constant 0 : i32
    %c0_i32_0 = arith.constant 0 : i32
    return %arg0, %c0_i32 : i32, i32
  }
}

</mosaic_0001>

<llo_original>
// kernel: tpu_custom_call.1
$region0: #{tpu_custom_call.1}
  #allocation0 [shape = 'u32[]', space=smem, size = 0x4, offset = 0x4, fixed_abs, tag = 'smem constant byte address 0x4 - core index']
  #allocation1 [shape = 'u32[72,128]{1,0:T(1,128)}', space=vmem, size = 0x9000, scoped, tag = 'internal scratch']
  %s0 = inlined_call_operand.vmem [shape: s32[2,8], index: 0, kind: input, shape index: {}]
  %s1 = inlined_call_operand.vmem [shape: f32[32,16], index: 1, kind: input, shape index: {}]
  %s2 = inlined_call_operand.vmem [shape: f32[16,128], index: 2, kind: input, shape index: {}]
  %s3 = inlined_call_operand.vmem [shape: f32[32,128], index: 3, kind: input, shape index: {}]
  %s4 = inlined_call_operand.vmem [shape: f32[1,128], index: 4, kind: input, shape index: {}]
  %s5 = inlined_call_operand.hbm [shape: f32[2,8,32], index: 5, kind: output, shape index: {0}]
  %s6 = inlined_call_operand.hbm [shape: f32[2,32], index: 6, kind: output, shape index: {1}]
  %s7 = inlined_call_operand.hbm [shape: f32[2,32], index: 7, kind: output, shape index: {2}]
  %8 = xla_tuple %s5, %s6, %s7
  %s9 = sld [smem:[#allocation0]]
  $region46: #{tpu_custom_call.1} parent=0
    _
  %s11 = ssub.s32 1, %s9
  %s12 = scalar_select 0, %s11, %s9
  $region1: #{tpu_custom_call.1} parent=0
    #allocation2 [shape = 'u8[8192]{0}', space=vmem, size = 0x2000, scoped, tag = 'output window, operand 0, single buffered']
    #allocation3 [shape = 's32[1]{0}', space=sflag, size = 0x4, scoped, tag = 'scoped memory for tpu_custom_call.1']
    #allocation4 [shape = 'u8[1024]{0}', space=vmem, size = 0x400, scoped, tag = 'output window, operand 1, single buffered']
    #allocation5 [shape = 's32[1]{0}', space=sflag, size = 0x4, scoped, tag = 'scoped memory for tpu_custom_call.1']
    #allocation6 [shape = 'u8[1024]{0}', space=vmem, size = 0x400, scoped, tag = 'output window, operand 2, single buffered']
    %13 = vsyncpa [#allocation3], 0
    %14 = vsyncpa [#allocation5], 0
    // Predicated region
    $region2: #{tpu_custom_call.1} parent=1 // pred_check
      _
    $region3: #{tpu_custom_call.1} parent=1 // pred_check_branch
      %16 = sbr.rel (0) target = $region5
    $region4: #{tpu_custom_call.1} parent=1 // pred_region
      _
    $region5: #{tpu_custom_call.1} parent=1 // pred_fallthru
      _
    // Predicated region
    $region6: #{tpu_custom_call.1} parent=1 // pred_check
      _
    $region7: #{tpu_custom_call.1} parent=1 // pred_check_branch
      %18 = sbr.rel (0) target = $region9
    $region8: #{tpu_custom_call.1} parent=1 // pred_region
      _
    $region9: #{tpu_custom_call.1} parent=1 // pred_fallthru
      _
    // Predicated region
    $region10: #{tpu_custom_call.1} parent=1 // pred_check
      _
    $region11: #{tpu_custom_call.1} parent=1 // pred_check_branch
      %20 = sbr.rel (0) target = $region13
    $region12: #{tpu_custom_call.1} parent=1 // pred_region
      _
    $region13: #{tpu_custom_call.1} parent=1 // pred_fallthru
      _
    // Predicated region
    $region14: #{tpu_custom_call.1} parent=1 // pred_check
      _
    $region15: #{tpu_custom_call.1} parent=1 // pred_check_branch
      %22 = sbr.rel (0) target = $region17
    $region16: #{tpu_custom_call.1} parent=1 // pred_region
      _
    $region17: #{tpu_custom_call.1} parent=1 // pred_fallthru
      _
    // Predicated region
    $region18: #{tpu_custom_call.1} parent=1 // pred_check
      _
    $region19: #{tpu_custom_call.1} parent=1 // pred_check_branch
      %24 = sbr.rel (0) target = $region21
    $region20: #{tpu_custom_call.1} parent=1 // pred_region
      _
    $region21: #{tpu_custom_call.1} parent=1 // pred_fallthru
      _
    %v25 = vld [vmem:[%s0] sm:$0x3]
    %v26 = vlaneseq
    %v27 = vand.u32 %v26, 127
    %v28 = vperm.slane %v25, 0
    %v29 = vlaneseq
    %v30 = vshrl.u32 %v29, 7
    %32 = vset.pattern.permute.xlu0 %v30
    %33 = vperm.xlu0 %32, %v28
    %v34 = vpop.permute.xlu0 %33
    %v35 = vperm.slane %v25, 1
    %v36 = vlaneseq
    %v37 = vshrl.u32 %v36, 7
    %39 = vset.pattern.permute.xlu0 %v37
    %40 = vperm.xlu0 %39, %v35
    %v41 = vpop.permute.xlu0 %40
    %vm42 = vcmp.eq.s32.totalorder %v27, %v34
    %vm43 = vcmp.eq.s32.totalorder %v27, %v41
    %v44 = vsel %vm42, 1, 0
    %v45 = vsel %vm43, 1, 0
    %v46 = vcvt.s32.f32 %v44
    %v47 = vcvt.s32.f32 %v45
    %v48 = vld [vmem:[%s1] sm:$0xff]
    %v49 = vld [vmem:[%s1 + $0x8] sm:$0xff]
    %v50 = vld [vmem:[%s1 + $0x10] sm:$0xff]
    %v51 = vld [vmem:[%s1 + $0x18] sm:$0xff]
    %vm52 = vcmask 261120
    %v54 = vsel %vm52, %v46, 0
    %v57 = vsel %vm52, %v47, 0
    %59 = vmatpush.msra.mxu0 0.0
    %60 = vmatpush.msra.mxu0 0.0
    %61 = vmatpush.msra.mxu0 0.0
    %62 = vmatpush.msra.mxu0 0.0
    %63 = vmatpush.msra.mxu0 0.0
    %64 = vmatpush.msra.mxu0 0.0
    %65 = vmatpush.msra.mxu0 0.0
    %66 = vmatpush.msra.mxu0 0.0
    %67 = vmatpush.msra.mxu0 0.0
    %68 = vmatpush.msra.mxu0 0.0
    %69 = vmatpush.msra.mxu0 0.0
    %70 = vmatpush.msra.mxu0 0.0
    %71 = vmatpush.msra.mxu0 %v51
    %72 = vmatpush.msra.mxu0 %v50
    %73 = vmatpush.msra.mxu0 %v49
    %74 = vmatpush.msra.mxu0 %v48
    %75 = vmatmul.f32.gmra.mxu0 %v54
    %v76 = vpop.f32.mrf.mxu0
    %v77 = vadd.f32 0.0, %v76
    %78 = vmatmul.f32.gmra.mxu0 %v57
    %v79 = vpop.f32.mrf.mxu0
    %v80 = vadd.f32 0.0, %v79
    %81 = vdwg.mxu0
    %v82 = vld [vmem:[%s2] sm:$0xff]
    %v83 = vld [vmem:[%s2 + $0x8] sm:$0xff]
    %v84 = vld [vmem:[%s4] sm:$0x1]
    %v86 = vperm.slane %v84, 0
    %vm88 = vcmask 130048
    %v90 = vsel %vm88, %v77, 0
    %v93 = vsel %vm88, %v80, 0
    %95 = vmatpush.msra.mxu0 0.0
    %96 = vmatpush.msra.mxu0 0.0
    %97 = vmatpush.msra.mxu0 0.0
    %98 = vmatpush.msra.mxu0 0.0
    %99 = vmatpush.msra.mxu0 0.0
    %100 = vmatpush.msra.mxu0 0.0
    %101 = vmatpush.msra.mxu0 0.0
    %102 = vmatpush.msra.mxu0 0.0
    %103 = vmatpush.msra.mxu0 0.0
    %104 = vmatpush.msra.mxu0 0.0
    %105 = vmatpush.msra.mxu0 0.0
    %106 = vmatpush.msra.mxu0 0.0
    %107 = vmatpush.msra.mxu0 0.0
    %108 = vmatpush.msra.mxu0 0.0
    %109 = vmatpush.msra.mxu0 %v83
    %110 = vmatpush.msra.mxu0 %v82
    %111 = vmatmul.f32.gmra.mxu0 %v90
    %v112 = vpop.f32.mrf.mxu0
    %v113 = vadd.f32 %v86, %v112
    %114 = vmatmul.f32.gmra.mxu0 %v93
    %v115 = vpop.f32.mrf.mxu0
    %v116 = vadd.f32 %v86, %v115
    %117 = vdwg.mxu0
    %v118 = vld [vmem:[%s3] sm:$0xff]
    %v119 = vld [vmem:[%s3 + $0x8] sm:$0xff]
    %v120 = vld [vmem:[%s3 + $0x10] sm:$0xff]
    %v121 = vld [vmem:[%s3 + $0x18] sm:$0xff]
    %v123 = vsel %vm52, 0.0, 0
    %125 = vmatpush.msra.mxu0 0.0
    %126 = vmatpush.msra.mxu0 0.0
    %127 = vmatpush.msra.mxu0 0.0
    %128 = vmatpush.msra.mxu0 0.0
    %129 = vmatpush.msra.mxu0 0.0
    %130 = vmatpush.msra.mxu0 0.0
    %131 = vmatpush.msra.mxu0 0.0
    %132 = vmatpush.msra.mxu0 0.0
    %133 = vmatpush.msra.mxu0 0.0
    %134 = vmatpush.msra.mxu0 0.0
    %135 = vmatpush.msra.mxu0 0.0
    %136 = vmatpush.msra.mxu0 0.0
    %137 = vmatpush.msra.mxu0 %v121
    %138 = vmatpush.msra.mxu0 %v120
    %139 = vmatpush.msra.mxu0 %v119
    %140 = vmatpush.msra.mxu0 %v118
    %141 = vmatmul.f32.gmra.mxu0 %v123
    %v142 = vpop.f32.mrf.mxu0
    %v143 = vadd.f32 0.0, %v142
    %144 = vdwg.mxu0
    %v146 = vrot.slane %v143, 1
    %v149 = vadd.f32 %v113, %v143
    %v150 = vadd.f32 %v116, %v146
    %v151 = vsub.f32 0.0, %v149
    %v152 = vsub.f32 0.0, %v150
    %v153 = vmul.f32 %v151, 1.442695
    %v154 = vpow.pop %v153
    %v155 = vmul.f32 %v152, 1.442695
    %v156 = vpow.pop %v155
    %v157 = vadd.f32 %v154, 1.0
    %v158 = vadd.f32 %v156, 1.0
    %v159 = vrcp.pop %v157
    %v160 = vmul.f32 %v157, %v159
    %v161 = vsub.f32 1.0, %v160
    %v162 = vmul.f32 %v159, %v161
    %v163 = vadd.f32 %v159, %v162
    %vm164 = vweird.f32 %v157
    %vm165 = vweird.f32 %v159
    %vm166 = vmor %vm164, %vm165
    %v167 = vsel %vm166, %v159, %v163
    %v168 = vand.u32 2147483647, %v157
    %vm169 = vcmp.eq.f32.partialorder %v168, 8.507059e+37
    %v170 = vand.u32 %v157, 2147483648
    %v171 = vor.u32 1.1754944e-38, %v170
    %v172 = vsel %vm169, %v171, %v167
    %v173 = vmul.f32 1.0, %v172
    %v174 = vrcp.pop %v158
    %v175 = vmul.f32 %v158, %v174
    %v176 = vsub.f32 1.0, %v175
    %v177 = vmul.f32 %v174, %v176
    %v178 = vadd.f32 %v174, %v177
    %vm179 = vweird.f32 %v158
    %vm180 = vweird.f32 %v174
    %vm181 = vmor %vm179, %vm180
    %v182 = vsel %vm181, %v174, %v178
    %v183 = vand.u32 2147483647, %v158
    %vm184 = vcmp.eq.f32.partialorder %v183, 8.507059e+37
    %v185 = vand.u32 %v158, 2147483648
    %v186 = vor.u32 1.1754944e-38, %v185
    %v187 = vsel %vm184, %v186, %v182
    %v188 = vmul.f32 1.0, %v187
    %v189 = vtanh.pop %v149
    %v190 = vtanh.pop %v150
    %v191 = vmul.f32 %v173, 0.0
    %v192 = vmul.f32 %v188, 0.0
    %195 = vrot.lane.b32.xlu0 %v189, 64
    %v196 = vpop.permute.xlu0 %195
    %197 = vrot.lane.b32.xlu0 %v190, 64
    %v198 = vpop.permute.xlu0 %197
    %v201 = vmul.f32 %v173, %v196
    %v202 = vmul.f32 %v188, %v198
    %205 = vrot.lane.b32.xlu0 %v201, 32
    %v206 = vpop.permute.xlu0 %205
    %207 = vrot.lane.b32.xlu0 %v202, 32
    %v208 = vpop.permute.xlu0 %207
    %v211 = vadd.f32 %v191, %v206
    %v212 = vadd.f32 %v192, %v208
    %v213 = vtanh.pop %v211
    %v214 = vtanh.pop %v212
    %217 = vrot.lane.b32.xlu0 %v213, 64
    %v218 = vpop.permute.xlu0 %217
    %219 = vrot.lane.b32.xlu0 %v214, 64
    %v220 = vpop.permute.xlu0 %219
    %v223 = vmul.f32 %v173, %v218
    %v224 = vmul.f32 %v188, %v220
    %227 = vrot.lane.b32.xlu0 %v223, 32
    %v228 = vpop.permute.xlu0 %227
    %229 = vrot.lane.b32.xlu0 %v224, 32
    %v230 = vpop.permute.xlu0 %229
    %vm233 = vcmask 253952
    %234 = vst.msk [vmem:[#allocation2] sm:$0x1] %vm233, %v228
    %235 = vst.msk [vmem:[#allocation2 + $0x8] sm:$0x1] %vm233, %v230
    %v236 = vrot.slane %v224, 7
    %vm237 = vcmask 1041409
    %v238 = vsel %vm237, %v236, %v223
    %239 = vrot.lane.b32.xlu0 %v238, 32
    %v240 = vpop.permute.xlu0 %239
    %v241 = vsel %vm52, %v240, 0
    %243 = vmatpush.msra.mxu0 0.0
    %244 = vmatpush.msra.mxu0 0.0
    %245 = vmatpush.msra.mxu0 0.0
    %246 = vmatpush.msra.mxu0 0.0
    %247 = vmatpush.msra.mxu0 0.0
    %248 = vmatpush.msra.mxu0 0.0
    %249 = vmatpush.msra.mxu0 0.0
    %250 = vmatpush.msra.mxu0 0.0
    %251 = vmatpush.msra.mxu0 0.0
    %252 = vmatpush.msra.mxu0 0.0
    %253 = vmatpush.msra.mxu0 0.0
    %254 = vmatpush.msra.mxu0 0.0
    %255 = vmatpush.msra.mxu0 %v121
    %256 = vmatpush.msra.mxu0 %v120
    %257 = vmatpush.msra.mxu0 %v119
    %258 = vmatpush.msra.mxu0 %v118
    %259 = vmatmul.f32.gmra.mxu0 %v241
    %v260 = vpop.f32.mrf.mxu0
    %v261 = vadd.f32 0.0, %v260
    %262 = vdwg.mxu0
    %v264 = vrot.slane %v261, 7
    %v267 = vadd.f32 %v113, %v264
    %v268 = vadd.f32 %v116, %v261
    %v269 = vsub.f32 0.0, %v267
    %v270 = vsub.f32 0.0, %v268
    %v271 = vmul.f32 %v269, 1.442695
    %v272 = vpow.pop %v271
    %v273 = vmul.f32 %v270, 1.442695
    %v274 = vpow.pop %v273
    %v275 = vadd.f32 %v272, 1.0
    %v276 = vadd.f32 %v274, 1.0
    %v277 = vrcp.pop %v275
    %v278 = vmul.f32 %v275, %v277
    %v279 = vsub.f32 1.0, %v278
    %v280 = vmul.f32 %v277, %v279
    %v281 = vadd.f32 %v277, %v280
    %vm282 = vweird.f32 %v275
    %vm283 = vweird.f32 %v277
    %vm284 = vmor %vm282, %vm283
    %v285 = vsel %vm284, %v277, %v281
    %v286 = vand.u32 2147483647, %v275
    %vm287 = vcmp.eq.f32.partialorder %v286, 8.507059e+37
    %v288 = vand.u32 %v275, 2147483648
    %v289 = vor.u32 1.1754944e-38, %v288
    %v290 = vsel %vm287, %v289, %v285
    %v291 = vmul.f32 1.0, %v290
    %v292 = vrcp.pop %v276
    %v293 = vmul.f32 %v276, %v292
    %v294 = vsub.f32 1.0, %v293
    %v295 = vmul.f32 %v292, %v294
    %v296 = vadd.f32 %v292, %v295
    %vm297 = vweird.f32 %v276
    %vm298 = vweird.f32 %v292
    %vm299 = vmor %vm297, %vm298
    %v300 = vsel %vm299, %v292, %v296
    %v301 = vand.u32 2147483647, %v276
    %vm302 = vcmp.eq.f32.partialorder %v301, 8.507059e+37
    %v303 = vand.u32 %v276, 2147483648
    %v304 = vor.u32 1.1754944e-38, %v303
    %v305 = vsel %vm302, %v304, %v300
    %v306 = vmul.f32 1.0, %v305
    %v307 = vtanh.pop %v267
    %v308 = vtanh.pop %v268
    %v311 = vrot.slane %v211, 7
    %v312 = vrot.slane %v212, 7
    %v315 = vmul.f32 %v291, %v311
    %v316 = vmul.f32 %v306, %v312
    %319 = vrot.lane.b32.xlu0 %v307, 64
    %v320 = vpop.permute.xlu0 %319
    %321 = vrot.lane.b32.xlu0 %v308, 64
    %v322 = vpop.permute.xlu0 %321
    %v325 = vmul.f32 %v291, %v320
    %v326 = vmul.f32 %v306, %v322
    %329 = vrot.lane.b32.xlu0 %v325, 32
    %v330 = vpop.permute.xlu0 %329
    %331 = vrot.lane.b32.xlu0 %v326, 32
    %v332 = vpop.permute.xlu0 %331
    %v335 = vadd.f32 %v315, %v330
    %v336 = vadd.f32 %v316, %v332
    %v337 = vtanh.pop %v335
    %v338 = vtanh.pop %v336
    %341 = vrot.lane.b32.xlu0 %v337, 64
    %v342 = vpop.permute.xlu0 %341
    %343 = vrot.lane.b32.xlu0 %v338, 64
    %v344 = vpop.permute.xlu0 %343
    %v347 = vmul.f32 %v291, %v342
    %v348 = vmul.f32 %v306, %v344
    %351 = vrot.lane.b32.xlu0 %v347, 32
    %v352 = vpop.permute.xlu0 %351
    %353 = vrot.lane.b32.xlu0 %v348, 32
    %v354 = vpop.permute.xlu0 %353
    %vm357 = vcmask 254977
    %358 = vst.msk [vmem:[#allocation2] sm:$0x2] %vm357, %v352
    %359 = vst.msk [vmem:[#allocation2 + $0x8] sm:$0x2] %vm357, %v354
    %v360 = vrot.slane %v347, 1
    %v361 = vsel %vm237, %v348, %v360
    %362 = vrot.lane.b32.xlu0 %v361, 32
    %v363 = vpop.permute.xlu0 %362
    %v364 = vsel %vm52, %v363, 0
    %366 = vmatpush.msra.mxu0 0.0
    %367 = vmatpush.msra.mxu0 0.0
    %368 = vmatpush.msra.mxu0 0.0
    %369 = vmatpush.msra.mxu0 0.0
    %370 = vmatpush.msra.mxu0 0.0
    %371 = vmatpush.msra.mxu0 0.0
    %372 = vmatpush.msra.mxu0 0.0
    %373 = vmatpush.msra.mxu0 0.0
    %374 = vmatpush.msra.mxu0 0.0
    %375 = vmatpush.msra.mxu0 0.0
    %376 = vmatpush.msra.mxu0 0.0
    %377 = vmatpush.msra.mxu0 0.0
    %378 = vmatpush.msra.mxu0 %v121
    %379 = vmatpush.msra.mxu0 %v120
    %380 = vmatpush.msra.mxu0 %v119
    %381 = vmatpush.msra.mxu0 %v118
    %382 = vmatmul.f32.gmra.mxu0 %v364
    %v383 = vpop.f32.mrf.mxu0
    %v384 = vadd.f32 0.0, %v383
    %385 = vdwg.mxu0
    %v387 = vrot.slane %v384, 6
    %v388 = vrot.slane %v384, 7
    %v391 = vadd.f32 %v113, %v387
    %v392 = vadd.f32 %v116, %v388
    %v393 = vsub.f32 0.0, %v391
    %v394 = vsub.f32 0.0, %v392
    %v395 = vmul.f32 %v393, 1.442695
    %v396 = vpow.pop %v395
    %v397 = vmul.f32 %v394, 1.442695
    %v398 = vpow.pop %v397
    %v399 = vadd.f32 %v396, 1.0
    %v400 = vadd.f32 %v398, 1.0
    %v401 = vrcp.pop %v399
    %v402 = vmul.f32 %v399, %v401
    %v403 = vsub.f32 1.0, %v402
    %v404 = vmul.f32 %v401, %v403
    %v405 = vadd.f32 %v401, %v404
    %vm406 = vweird.f32 %v399
    %vm407 = vweird.f32 %v401
    %vm408 = vmor %vm406, %vm407
    %v409 = vsel %vm408, %v401, %v405
    %v410 = vand.u32 2147483647, %v399
    %vm411 = vcmp.eq.f32.partialorder %v410, 8.507059e+37
    %v412 = vand.u32 %v399, 2147483648
    %v413 = vor.u32 1.1754944e-38, %v412
    %v414 = vsel %vm411, %v413, %v409
    %v415 = vmul.f32 1.0, %v414
    %v416 = vrcp.pop %v400
    %v417 = vmul.f32 %v400, %v416
    %v418 = vsub.f32 1.0, %v417
    %v419 = vmul.f32 %v416, %v418
    %v420 = vadd.f32 %v416, %v419
    %vm421 = vweird.f32 %v400
    %vm422 = vweird.f32 %v416
    %vm423 = vmor %vm421, %vm422
    %v424 = vsel %vm423, %v416, %v420
    %v425 = vand.u32 2147483647, %v400
    %vm426 = vcmp.eq.f32.partialorder %v425, 8.507059e+37
    %v427 = vand.u32 %v400, 2147483648
    %v428 = vor.u32 1.1754944e-38, %v427
    %v429 = vsel %vm426, %v428, %v424
    %v430 = vmul.f32 1.0, %v429
    %v431 = vtanh.pop %v391
    %v432 = vtanh.pop %v392
    %v435 = vrot.slane %v335, 7
    %v436 = vrot.slane %v336, 7
    %v439 = vmul.f32 %v415, %v435
    %v440 = vmul.f32 %v430, %v436
    %443 = vrot.lane.b32.xlu0 %v431, 64
    %v444 = vpop.permute.xlu0 %443
    %445 = vrot.lane.b32.xlu0 %v432, 64
    %v446 = vpop.permute.xlu0 %445
    %v449 = vmul.f32 %v415, %v444
    %v450 = vmul.f32 %v430, %v446
    %453 = vrot.lane.b32.xlu0 %v449, 32
    %v454 = vpop.permute.xlu0 %453
    %455 = vrot.lane.b32.xlu0 %v450, 32
    %v456 = vpop.permute.xlu0 %455
    %v459 = vadd.f32 %v439, %v454
    %v460 = vadd.f32 %v440, %v456
    %v461 = vtanh.pop %v459
    %v462 = vtanh.pop %v460
    %465 = vrot.lane.b32.xlu0 %v461, 64
    %v466 = vpop.permute.xlu0 %465
    %467 = vrot.lane.b32.xlu0 %v462, 64
    %v468 = vpop.permute.xlu0 %467
    %v471 = vmul.f32 %v415, %v466
    %v472 = vmul.f32 %v430, %v468
    %475 = vrot.lane.b32.xlu0 %v471, 32
    %v476 = vpop.permute.xlu0 %475
    %477 = vrot.lane.b32.xlu0 %v472, 32
    %v478 = vpop.permute.xlu0 %477
    %vm481 = vcmask 256002
    %482 = vst.msk [vmem:[#allocation2] sm:$0x4] %vm481, %v476
    %483 = vst.msk [vmem:[#allocation2 + $0x8] sm:$0x4] %vm481, %v478
    %v484 = vrot.slane %v471, 2
    %v485 = vrot.slane %v472, 1
    %v486 = vsel %vm237, %v485, %v484
    %487 = vrot.lane.b32.xlu0 %v486, 32
    %v488 = vpop.permute.xlu0 %487
    %v489 = vsel %vm52, %v488, 0
    %491 = vmatpush.msra.mxu0 0.0
    %492 = vmatpush.msra.mxu0 0.0
    %493 = vmatpush.msra.mxu0 0.0
    %494 = vmatpush.msra.mxu0 0.0
    %495 = vmatpush.msra.mxu0 0.0
    %496 = vmatpush.msra.mxu0 0.0
    %497 = vmatpush.msra.mxu0 0.0
    %498 = vmatpush.msra.mxu0 0.0
    %499 = vmatpush.msra.mxu0 0.0
    %500 = vmatpush.msra.mxu0 0.0
    %501 = vmatpush.msra.mxu0 0.0
    %502 = vmatpush.msra.mxu0 0.0
    %503 = vmatpush.msra.mxu0 %v121
    %504 = vmatpush.msra.mxu0 %v120
    %505 = vmatpush.msra.mxu0 %v119
    %506 = vmatpush.msra.mxu0 %v118
    %507 = vmatmul.f32.gmra.mxu0 %v489
    %v508 = vpop.f32.mrf.mxu0
    %v509 = vadd.f32 0.0, %v508
    %510 = vdwg.mxu0
    %v512 = vrot.slane %v509, 5
    %v513 = vrot.slane %v509, 6
    %v516 = vadd.f32 %v113, %v512
    %v517 = vadd.f32 %v116, %v513
    %v518 = vsub.f32 0.0, %v516
    %v519 = vsub.f32 0.0, %v517
    %v520 = vmul.f32 %v518, 1.442695
    %v521 = vpow.pop %v520
    %v522 = vmul.f32 %v519, 1.442695
    %v523 = vpow.pop %v522
    %v524 = vadd.f32 %v521, 1.0
    %v525 = vadd.f32 %v523, 1.0
    %v526 = vrcp.pop %v524
    %v527 = vmul.f32 %v524, %v526
    %v528 = vsub.f32 1.0, %v527
    %v529 = vmul.f32 %v526, %v528
    %v530 = vadd.f32 %v526, %v529
    %vm531 = vweird.f32 %v524
    %vm532 = vweird.f32 %v526
    %vm533 = vmor %vm531, %vm532
    %v534 = vsel %vm533, %v526, %v530
    %v535 = vand.u32 2147483647, %v524
    %vm536 = vcmp.eq.f32.partialorder %v535, 8.507059e+37
    %v537 = vand.u32 %v524, 2147483648
    %v538 = vor.u32 1.1754944e-38, %v537
    %v539 = vsel %vm536, %v538, %v534
    %v540 = vmul.f32 1.0, %v539
    %v541 = vrcp.pop %v525
    %v542 = vmul.f32 %v525, %v541
    %v543 = vsub.f32 1.0, %v542
    %v544 = vmul.f32 %v541, %v543
    %v545 = vadd.f32 %v541, %v544
    %vm546 = vweird.f32 %v525
    %vm547 = vweird.f32 %v541
    %vm548 = vmor %vm546, %vm547
    %v549 = vsel %vm548, %v541, %v545
    %v550 = vand.u32 2147483647, %v525
    %vm551 = vcmp.eq.f32.partialorder %v550, 8.507059e+37
    %v552 = vand.u32 %v525, 2147483648
    %v553 = vor.u32 1.1754944e-38, %v552
    %v554 = vsel %vm551, %v553, %v549
    %v555 = vmul.f32 1.0, %v554
    %v556 = vtanh.pop %v516
    %v557 = vtanh.pop %v517
    %v560 = vrot.slane %v459, 7
    %v561 = vrot.slane %v460, 7
    %v564 = vmul.f32 %v540, %v560
    %v565 = vmul.f32 %v555, %v561
    %568 = vrot.lane.b32.xlu0 %v556, 64
    %v569 = vpop.permute.xlu0 %568
    %570 = vrot.lane.b32.xlu0 %v557, 64
    %v571 = vpop.permute.xlu0 %570
    %v574 = vmul.f32 %v540, %v569
    %v575 = vmul.f32 %v555, %v571
    %578 = vrot.lane.b32.xlu0 %v574, 32
    %v579 = vpop.permute.xlu0 %578
    %580 = vrot.lane.b32.xlu0 %v575, 32
    %v581 = vpop.permute.xlu0 %580
    %v584 = vadd.f32 %v564, %v579
    %v585 = vadd.f32 %v565, %v581
    %v586 = vtanh.pop %v584
    %v587 = vtanh.pop %v585
    %590 = vrot.lane.b32.xlu0 %v586, 64
    %v591 = vpop.permute.xlu0 %590
    %592 = vrot.lane.b32.xlu0 %v587, 64
    %v593 = vpop.permute.xlu0 %592
    %v596 = vmul.f32 %v540, %v591
    %v597 = vmul.f32 %v555, %v593
    %600 = vrot.lane.b32.xlu0 %v596, 32
    %v601 = vpop.permute.xlu0 %600
    %602 = vrot.lane.b32.xlu0 %v597, 32
    %v603 = vpop.permute.xlu0 %602
    %vm606 = vcmask 257027
    %607 = vst.msk [vmem:[#allocation2] sm:$0x8] %vm606, %v601
    %608 = vst.msk [vmem:[#allocation2 + $0x8] sm:$0x8] %vm606, %v603
    %v609 = vrot.slane %v596, 3
    %v610 = vrot.slane %v597, 2
    %v611 = vsel %vm237, %v610, %v609
    %612 = vrot.lane.b32.xlu0 %v611, 32
    %v613 = vpop.permute.xlu0 %612
    %v614 = vsel %vm52, %v613, 0
    %616 = vmatpush.msra.mxu0 0.0
    %617 = vmatpush.msra.mxu0 0.0
    %618 = vmatpush.msra.mxu0 0.0
    %619 = vmatpush.msra.mxu0 0.0
    %620 = vmatpush.msra.mxu0 0.0
    %621 = vmatpush.msra.mxu0 0.0
    %622 = vmatpush.msra.mxu0 0.0
    %623 = vmatpush.msra.mxu0 0.0
    %624 = vmatpush.msra.mxu0 0.0
    %625 = vmatpush.msra.mxu0 0.0
    %626 = vmatpush.msra.mxu0 0.0
    %627 = vmatpush.msra.mxu0 0.0
    %628 = vmatpush.msra.mxu0 %v121
    %629 = vmatpush.msra.mxu0 %v120
    %630 = vmatpush.msra.mxu0 %v119
    %631 = vmatpush.msra.mxu0 %v118
    %632 = vmatmul.f32.gmra.mxu0 %v614
    %v633 = vpop.f32.mrf.mxu0
    %v634 = vadd.f32 0.0, %v633
    %635 = vdwg.mxu0
    %v637 = vrot.slane %v634, 4
    %v638 = vrot.slane %v634, 5
    %v641 = vadd.f32 %v113, %v637
    %v642 = vadd.f32 %v116, %v638
    %v643 = vsub.f32 0.0, %v641
    %v644 = vsub.f32 0.0, %v642
    %v645 = vmul.f32 %v643, 1.442695
    %v646 = vpow.pop %v645
    %v647 = vmul.f32 %v644, 1.442695
    %v648 = vpow.pop %v647
    %v649 = vadd.f32 %v646, 1.0
    %v650 = vadd.f32 %v648, 1.0
    %v651 = vrcp.pop %v649
    %v652 = vmul.f32 %v649, %v651
    %v653 = vsub.f32 1.0, %v652
    %v654 = vmul.f32 %v651, %v653
    %v655 = vadd.f32 %v651, %v654
    %vm656 = vweird.f32 %v649
    %vm657 = vweird.f32 %v651
    %vm658 = vmor %vm656, %vm657
    %v659 = vsel %vm658, %v651, %v655
    %v660 = vand.u32 2147483647, %v649
    %vm661 = vcmp.eq.f32.partialorder %v660, 8.507059e+37
    %v662 = vand.u32 %v649, 2147483648
    %v663 = vor.u32 1.1754944e-38, %v662
    %v664 = vsel %vm661, %v663, %v659
    %v665 = vmul.f32 1.0, %v664
    %v666 = vrcp.pop %v650
    %v667 = vmul.f32 %v650, %v666
    %v668 = vsub.f32 1.0, %v667
    %v669 = vmul.f32 %v666, %v668
    %v670 = vadd.f32 %v666, %v669
    %vm671 = vweird.f32 %v650
    %vm672 = vweird.f32 %v666
    %vm673 = vmor %vm671, %vm672
    %v674 = vsel %vm673, %v666, %v670
    %v675 = vand.u32 2147483647, %v650
    %vm676 = vcmp.eq.f32.partialorder %v675, 8.507059e+37
    %v677 = vand.u32 %v650, 2147483648
    %v678 = vor.u32 1.1754944e-38, %v677
    %v679 = vsel %vm676, %v678, %v674
    %v680 = vmul.f32 1.0, %v679
    %v681 = vtanh.pop %v641
    %v682 = vtanh.pop %v642
    %v685 = vrot.slane %v584, 7
    %v686 = vrot.slane %v585, 7
    %v689 = vmul.f32 %v665, %v685
    %v690 = vmul.f32 %v680, %v686
    %693 = vrot.lane.b32.xlu0 %v681, 64
    %v694 = vpop.permute.xlu0 %693
    %695 = vrot.lane.b32.xlu0 %v682, 64
    %v696 = vpop.permute.xlu0 %695
    %v699 = vmul.f32 %v665, %v694
    %v700 = vmul.f32 %v680, %v696
    %703 = vrot.lane.b32.xlu0 %v699, 32
    %v704 = vpop.permute.xlu0 %703
    %705 = vrot.lane.b32.xlu0 %v700, 32
    %v706 = vpop.permute.xlu0 %705
    %v709 = vadd.f32 %v689, %v704
    %v710 = vadd.f32 %v690, %v706
    %v711 = vtanh.pop %v709
    %v712 = vtanh.pop %v710
    %715 = vrot.lane.b32.xlu0 %v711, 64
    %v716 = vpop.permute.xlu0 %715
    %717 = vrot.lane.b32.xlu0 %v712, 64
    %v718 = vpop.permute.xlu0 %717
    %v721 = vmul.f32 %v665, %v716
    %v722 = vmul.f32 %v680, %v718
    %725 = vrot.lane.b32.xlu0 %v721, 32
    %v726 = vpop.permute.xlu0 %725
    %727 = vrot.lane.b32.xlu0 %v722, 32
    %v728 = vpop.permute.xlu0 %727
    %vm731 = vcmask 258052
    %732 = vst.msk [vmem:[#allocation2] sm:$0x10] %vm731, %v726
    %733 = vst.msk [vmem:[#allocation2 + $0x8] sm:$0x10] %vm731, %v728
    %v734 = vrot.slane %v721, 4
    %v735 = vrot.slane %v722, 3
    %v736 = vsel %vm237, %v735, %v734
    %737 = vrot.lane.b32.xlu0 %v736, 32
    %v738 = vpop.permute.xlu0 %737
    %v739 = vsel %vm52, %v738, 0
    %741 = vmatpush.msra.mxu0 0.0
    %742 = vmatpush.msra.mxu0 0.0
    %743 = vmatpush.msra.mxu0 0.0
    %744 = vmatpush.msra.mxu0 0.0
    %745 = vmatpush.msra.mxu0 0.0
    %746 = vmatpush.msra.mxu0 0.0
    %747 = vmatpush.msra.mxu0 0.0
    %748 = vmatpush.msra.mxu0 0.0
    %749 = vmatpush.msra.mxu0 0.0
    %750 = vmatpush.msra.mxu0 0.0
    %751 = vmatpush.msra.mxu0 0.0
    %752 = vmatpush.msra.mxu0 0.0
    %753 = vmatpush.msra.mxu0 %v121
    %754 = vmatpush.msra.mxu0 %v120
    %755 = vmatpush.msra.mxu0 %v119
    %756 = vmatpush.msra.mxu0 %v118
    %757 = vmatmul.f32.gmra.mxu0 %v739
    %v758 = vpop.f32.mrf.mxu0
    %v759 = vadd.f32 0.0, %v758
    %760 = vdwg.mxu0
    %v762 = vrot.slane %v759, 3
    %v763 = vrot.slane %v759, 4
    %v766 = vadd.f32 %v113, %v762
    %v767 = vadd.f32 %v116, %v763
    %v768 = vsub.f32 0.0, %v766
    %v769 = vsub.f32 0.0, %v767
    %v770 = vmul.f32 %v768, 1.442695
    %v771 = vpow.pop %v770
    %v772 = vmul.f32 %v769, 1.442695
    %v773 = vpow.pop %v772
    %v774 = vadd.f32 %v771, 1.0
    %v775 = vadd.f32 %v773, 1.0
    %v776 = vrcp.pop %v774
    %v777 = vmul.f32 %v774, %v776
    %v778 = vsub.f32 1.0, %v777
    %v779 = vmul.f32 %v776, %v778
    %v780 = vadd.f32 %v776, %v779
    %vm781 = vweird.f32 %v774
    %vm782 = vweird.f32 %v776
    %vm783 = vmor %vm781, %vm782
    %v784 = vsel %vm783, %v776, %v780
    %v785 = vand.u32 2147483647, %v774
    %vm786 = vcmp.eq.f32.partialorder %v785, 8.507059e+37
    %v787 = vand.u32 %v774, 2147483648
    %v788 = vor.u32 1.1754944e-38, %v787
    %v789 = vsel %vm786, %v788, %v784
    %v790 = vmul.f32 1.0, %v789
    %v791 = vrcp.pop %v775
    %v792 = vmul.f32 %v775, %v791
    %v793 = vsub.f32 1.0, %v792
    %v794 = vmul.f32 %v791, %v793
    %v795 = vadd.f32 %v791, %v794
    %vm796 = vweird.f32 %v775
    %vm797 = vweird.f32 %v791
    %vm798 = vmor %vm796, %vm797
    %v799 = vsel %vm798, %v791, %v795
    %v800 = vand.u32 2147483647, %v775
    %vm801 = vcmp.eq.f32.partialorder %v800, 8.507059e+37
    %v802 = vand.u32 %v775, 2147483648
    %v803 = vor.u32 1.1754944e-38, %v802
    %v804 = vsel %vm801, %v803, %v799
    %v805 = vmul.f32 1.0, %v804
    %v806 = vtanh.pop %v766
    %v807 = vtanh.pop %v767
    %v810 = vrot.slane %v709, 7
    %v811 = vrot.slane %v710, 7
    %v814 = vmul.f32 %v790, %v810
    %v815 = vmul.f32 %v805, %v811
    %818 = vrot.lane.b32.xlu0 %v806, 64
    %v819 = vpop.permute.xlu0 %818
    %820 = vrot.lane.b32.xlu0 %v807, 64
    %v821 = vpop.permute.xlu0 %820
    %v824 = vmul.f32 %v790, %v819
    %v825 = vmul.f32 %v805, %v821
    %828 = vrot.lane.b32.xlu0 %v824, 32
    %v829 = vpop.permute.xlu0 %828
    %830 = vrot.lane.b32.xlu0 %v825, 32
    %v831 = vpop.permute.xlu0 %830
    %v834 = vadd.f32 %v814, %v829
    %v835 = vadd.f32 %v815, %v831
    %v836 = vtanh.pop %v834
    %v837 = vtanh.pop %v835
    %840 = vrot.lane.b32.xlu0 %v836, 64
    %v841 = vpop.permute.xlu0 %840
    %842 = vrot.lane.b32.xlu0 %v837, 64
    %v843 = vpop.permute.xlu0 %842
    %v846 = vmul.f32 %v790, %v841
    %v847 = vmul.f32 %v805, %v843
    %850 = vrot.lane.b32.xlu0 %v846, 32
    %v851 = vpop.permute.xlu0 %850
    %852 = vrot.lane.b32.xlu0 %v847, 32
    %v853 = vpop.permute.xlu0 %852
    %vm856 = vcmask 259077
    %857 = vst.msk [vmem:[#allocation2] sm:$0x20] %vm856, %v851
    %858 = vst.msk [vmem:[#allocation2 + $0x8] sm:$0x20] %vm856, %v853
    %v859 = vrot.slane %v846, 5
    %v860 = vrot.slane %v847, 4
    %v861 = vsel %vm237, %v860, %v859
    %862 = vrot.lane.b32.xlu0 %v861, 32
    %v863 = vpop.permute.xlu0 %862
    %v864 = vsel %vm52, %v863, 0
    %866 = vmatpush.msra.mxu0 0.0
    %867 = vmatpush.msra.mxu0 0.0
    %868 = vmatpush.msra.mxu0 0.0
    %869 = vmatpush.msra.mxu0 0.0
    %870 = vmatpush.msra.mxu0 0.0
    %871 = vmatpush.msra.mxu0 0.0
    %872 = vmatpush.msra.mxu0 0.0
    %873 = vmatpush.msra.mxu0 0.0
    %874 = vmatpush.msra.mxu0 0.0
    %875 = vmatpush.msra.mxu0 0.0
    %876 = vmatpush.msra.mxu0 0.0
    %877 = vmatpush.msra.mxu0 0.0
    %878 = vmatpush.msra.mxu0 %v121
    %879 = vmatpush.msra.mxu0 %v120
    %880 = vmatpush.msra.mxu0 %v119
    %881 = vmatpush.msra.mxu0 %v118
    %882 = vmatmul.f32.gmra.mxu0 %v864
    %v883 = vpop.f32.mrf.mxu0
    %v884 = vadd.f32 0.0, %v883
    %885 = vdwg.mxu0
    %v887 = vrot.slane %v884, 2
    %v888 = vrot.slane %v884, 3
    %v891 = vadd.f32 %v113, %v887
    %v892 = vadd.f32 %v116, %v888
    %v893 = vsub.f32 0.0, %v891
    %v894 = vsub.f32 0.0, %v892
    %v895 = vmul.f32 %v893, 1.442695
    %v896 = vpow.pop %v895
    %v897 = vmul.f32 %v894, 1.442695
    %v898 = vpow.pop %v897
    %v899 = vadd.f32 %v896, 1.0
    %v900 = vadd.f32 %v898, 1.0
    %v901 = vrcp.pop %v899
    %v902 = vmul.f32 %v899, %v901
    %v903 = vsub.f32 1.0, %v902
    %v904 = vmul.f32 %v901, %v903
    %v905 = vadd.f32 %v901, %v904
    %vm906 = vweird.f32 %v899
    %vm907 = vweird.f32 %v901
    %vm908 = vmor %vm906, %vm907
    %v909 = vsel %vm908, %v901, %v905
    %v910 = vand.u32 2147483647, %v899
    %vm911 = vcmp.eq.f32.partialorder %v910, 8.507059e+37
    %v912 = vand.u32 %v899, 2147483648
    %v913 = vor.u32 1.1754944e-38, %v912
    %v914 = vsel %vm911, %v913, %v909
    %v915 = vmul.f32 1.0, %v914
    %v916 = vrcp.pop %v900
    %v917 = vmul.f32 %v900, %v916
    %v918 = vsub.f32 1.0, %v917
    %v919 = vmul.f32 %v916, %v918
    %v920 = vadd.f32 %v916, %v919
    %vm921 = vweird.f32 %v900
    %vm922 = vweird.f32 %v916
    %vm923 = vmor %vm921, %vm922
    %v924 = vsel %vm923, %v916, %v920
    %v925 = vand.u32 2147483647, %v900
    %vm926 = vcmp.eq.f32.partialorder %v925, 8.507059e+37
    %v927 = vand.u32 %v900, 2147483648
    %v928 = vor.u32 1.1754944e-38, %v927
    %v929 = vsel %vm926, %v928, %v924
    %v930 = vmul.f32 1.0, %v929
    %v931 = vtanh.pop %v891
    %v932 = vtanh.pop %v892
    %v935 = vrot.slane %v834, 7
    %v936 = vrot.slane %v835, 7
    %v939 = vmul.f32 %v915, %v935
    %v940 = vmul.f32 %v930, %v936
    %943 = vrot.lane.b32.xlu0 %v931, 64
    %v944 = vpop.permute.xlu0 %943
    %945 = vrot.lane.b32.xlu0 %v932, 64
    %v946 = vpop.permute.xlu0 %945
    %v949 = vmul.f32 %v915, %v944
    %v950 = vmul.f32 %v930, %v946
    %953 = vrot.lane.b32.xlu0 %v949, 32
    %v954 = vpop.permute.xlu0 %953
    %955 = vrot.lane.b32.xlu0 %v950, 32
    %v956 = vpop.permute.xlu0 %955
    %v959 = vadd.f32 %v939, %v954
    %v960 = vadd.f32 %v940, %v956
    %v961 = vtanh.pop %v959
    %v962 = vtanh.pop %v960
    %965 = vrot.lane.b32.xlu0 %v961, 64
    %v966 = vpop.permute.xlu0 %965
    %967 = vrot.lane.b32.xlu0 %v962, 64
    %v968 = vpop.permute.xlu0 %967
    %v971 = vmul.f32 %v915, %v966
    %v972 = vmul.f32 %v930, %v968
    %975 = vrot.lane.b32.xlu0 %v971, 32
    %v976 = vpop.permute.xlu0 %975
    %977 = vrot.lane.b32.xlu0 %v972, 32
    %v978 = vpop.permute.xlu0 %977
    %vm981 = vcmask 260102
    %982 = vst.msk [vmem:[#allocation2] sm:$0x40] %vm981, %v976
    %983 = vst.msk [vmem:[#allocation2 + $0x8] sm:$0x40] %vm981, %v978
    %v984 = vrot.slane %v971, 6
    %v985 = vrot.slane %v972, 5
    %v986 = vsel %vm237, %v985, %v984
    %987 = vrot.lane.b32.xlu0 %v986, 32
    %v988 = vpop.permute.xlu0 %987
    %v989 = vsel %vm52, %v988, 0
    %991 = vmatpush.msra.mxu0 0.0
    %992 = vmatpush.msra.mxu0 0.0
    %993 = vmatpush.msra.mxu0 0.0
    %994 = vmatpush.msra.mxu0 0.0
    %995 = vmatpush.msra.mxu0 0.0
    %996 = vmatpush.msra.mxu0 0.0
    %997 = vmatpush.msra.mxu0 0.0
    %998 = vmatpush.msra.mxu0 0.0
    %999 = vmatpush.msra.mxu0 0.0
    %1000 = vmatpush.msra.mxu0 0.0
    %1001 = vmatpush.msra.mxu0 0.0
    %1002 = vmatpush.msra.mxu0 0.0
    %1003 = vmatpush.msra.mxu0 %v121
    %1004 = vmatpush.msra.mxu0 %v120
    %1005 = vmatpush.msra.mxu0 %v119
    %1006 = vmatpush.msra.mxu0 %v118
    %1007 = vmatmul.f32.gmra.mxu0 %v989
    %v1008 = vpop.f32.mrf.mxu0
    %v1009 = vadd.f32 0.0, %v1008
    %1010 = vdwg.mxu0
    %v1012 = vrot.slane %v1009, 1
    %v1013 = vrot.slane %v1009, 2
    %v1016 = vadd.f32 %v113, %v1012
    %v1017 = vadd.f32 %v116, %v1013
    %v1018 = vsub.f32 0.0, %v1016
    %v1019 = vsub.f32 0.0, %v1017
    %v1020 = vmul.f32 %v1018, 1.442695
    %v1021 = vpow.pop %v1020
    %v1022 = vmul.f32 %v1019, 1.442695
    %v1023 = vpow.pop %v1022
    %v1024 = vadd.f32 %v1021, 1.0
    %v1025 = vadd.f32 %v1023, 1.0
    %v1026 = vrcp.pop %v1024
    %v1027 = vmul.f32 %v1024, %v1026
    %v1028 = vsub.f32 1.0, %v1027
    %v1029 = vmul.f32 %v1026, %v1028
    %v1030 = vadd.f32 %v1026, %v1029
    %vm1031 = vweird.f32 %v1024
    %vm1032 = vweird.f32 %v1026
    %vm1033 = vmor %vm1031, %vm1032
    %v1034 = vsel %vm1033, %v1026, %v1030
    %v1035 = vand.u32 2147483647, %v1024
    %vm1036 = vcmp.eq.f32.partialorder %v1035, 8.507059e+37
    %v1037 = vand.u32 %v1024, 2147483648
    %v1038 = vor.u32 1.1754944e-38, %v1037
    %v1039 = vsel %vm1036, %v1038, %v1034
    %v1040 = vmul.f32 1.0, %v1039
    %v1041 = vrcp.pop %v1025
    %v1042 = vmul.f32 %v1025, %v1041
    %v1043 = vsub.f32 1.0, %v1042
    %v1044 = vmul.f32 %v1041, %v1043
    %v1045 = vadd.f32 %v1041, %v1044
    %vm1046 = vweird.f32 %v1025
    %vm1047 = vweird.f32 %v1041
    %vm1048 = vmor %vm1046, %vm1047
    %v1049 = vsel %vm1048, %v1041, %v1045
    %v1050 = vand.u32 2147483647, %v1025
    %vm1051 = vcmp.eq.f32.partialorder %v1050, 8.507059e+37
    %v1052 = vand.u32 %v1025, 2147483648
    %v1053 = vor.u32 1.1754944e-38, %v1052
    %v1054 = vsel %vm1051, %v1053, %v1049
    %v1055 = vmul.f32 1.0, %v1054
    %v1056 = vtanh.pop %v1016
    %v1057 = vtanh.pop %v1017
    %v1060 = vrot.slane %v959, 7
    %v1061 = vrot.slane %v960, 7
    %v1064 = vmul.f32 %v1040, %v1060
    %v1065 = vmul.f32 %v1055, %v1061
    %1068 = vrot.lane.b32.xlu0 %v1056, 64
    %v1069 = vpop.permute.xlu0 %1068
    %1070 = vrot.lane.b32.xlu0 %v1057, 64
    %v1071 = vpop.permute.xlu0 %1070
    %v1074 = vmul.f32 %v1040, %v1069
    %v1075 = vmul.f32 %v1055, %v1071
    %1078 = vrot.lane.b32.xlu0 %v1074, 32
    %v1079 = vpop.permute.xlu0 %1078
    %1080 = vrot.lane.b32.xlu0 %v1075, 32
    %v1081 = vpop.permute.xlu0 %1080
    %v1084 = vadd.f32 %v1064, %v1079
    %v1085 = vadd.f32 %v1065, %v1081
    %v1086 = vtanh.pop %v1084
    %v1087 = vtanh.pop %v1085
    %1090 = vrot.lane.b32.xlu0 %v1086, 64
    %v1091 = vpop.permute.xlu0 %1090
    %1092 = vrot.lane.b32.xlu0 %v1087, 64
    %v1093 = vpop.permute.xlu0 %1092
    %v1096 = vmul.f32 %v1040, %v1091
    %v1097 = vmul.f32 %v1055, %v1093
    %1100 = vrot.lane.b32.xlu0 %v1096, 32
    %v1101 = vpop.permute.xlu0 %1100
    %1102 = vrot.lane.b32.xlu0 %v1097, 32
    %v1103 = vpop.permute.xlu0 %1102
    %vm1106 = vcmask 261127
    %1107 = vst.msk [vmem:[#allocation2] sm:$0x80] %vm1106, %v1101
    %1108 = vst.msk [vmem:[#allocation2 + $0x8] sm:$0x80] %vm1106, %v1103
    %v1109 = vrot.slane %v1097, 7
    %1110 = vrot.lane.b32.xlu0 %v1109, 32
    %v1111 = vpop.permute.xlu0 %1110
    %1113 = vst.msk [vmem:[#allocation4 - $0x7] sm:$0x80] %vm1106, %v1101
    %1114 = vst.msk [vmem:[#allocation4 + $0x1] sm:$0x1] %vm233, %v1111
    %v1117 = vrot.slane %v1085, 7
    %1118 = vrot.lane.b32.xlu0 %v1084, 96
    %v1119 = vpop.permute.xlu0 %1118
    %1120 = vrot.lane.b32.xlu0 %v1117, 96
    %v1121 = vpop.permute.xlu0 %1120
    %1124 = vst.msk [vmem:[#allocation6 - $0x7] sm:$0x80] %vm1106, %v1119
    %1125 = vst.msk [vmem:[#allocation6 + $0x1] sm:$0x1] %vm233, %v1121
    // Predicated region
    $region22: #{tpu_custom_call.1} parent=1 // pred_check
      _
    $region23: #{tpu_custom_call.1} parent=1 // pred_check_branch
      %1127 = sbr.rel (0) target = $region25
    $region24: #{tpu_custom_call.1} parent=1 // pred_region
      %1129 = vsyncadd [#allocation3], 0
      %s1130 = sshll.u32 [#allocation2], 4
      %s1131 = int_to_ptr.vmem [resolvable:$true] %s1130
      %s1132 = sshll.u32 %s5, 4
      %s1133 = int_to_ptr.hbm [resolvable:$true] %s1132
      %1138 = dma.vmem_to_hbm [thread:$0]  %s1131, 256, %s1133, [#allocation3], 128, 128, 8
    $region25: #{tpu_custom_call.1} parent=1 // pred_fallthru
      _
    // Predicated region
    $region26: #{tpu_custom_call.1} parent=1 // pred_check
      _
    $region27: #{tpu_custom_call.1} parent=1 // pred_check_branch
      %1140 = sbr.rel (0) target = $region29
    $region28: #{tpu_custom_call.1} parent=1 // pred_region
      %1142 = vsyncadd [#allocation5], 0
      %s1144 = sshll.u32 [#allocation4], 4
      %s1145 = int_to_ptr.vmem [resolvable:$true] %s1144
      %s1146 = sshll.u32 %s6, 4
      %s1147 = int_to_ptr.hbm [resolvable:$true] %s1146
      %1149 = dma.vmem_to_hbm [thread:$0]  %s1145, 32, %s1147, [#allocation5]
    $region29: #{tpu_custom_call.1} parent=1 // pred_fallthru
      _
    // Predicated region
    $region30: #{tpu_custom_call.1} parent=1 // pred_check
      _
    $region31: #{tpu_custom_call.1} parent=1 // pred_check_branch
      %1151 = sbr.rel (0) target = $region33
    $region32: #{tpu_custom_call.1} parent=1 // pred_region
      %1153 = vsyncadd [#allocation5], 0
      %s1155 = sshll.u32 [#allocation6], 4
      %s1156 = int_to_ptr.vmem [resolvable:$true] %s1155
      %s1157 = sshll.u32 %s7, 4
      %s1158 = int_to_ptr.hbm [resolvable:$true] %s1157
      %1160 = dma.vmem_to_hbm [thread:$0]  %s1156, 32, %s1158, [#allocation5]
    $region33: #{tpu_custom_call.1} parent=1 // pred_fallthru
      _
    // Predicated region
    $region34: #{tpu_custom_call.1} parent=1 // pred_check
      _
    $region35: #{tpu_custom_call.1} parent=1 // pred_check_branch
      %1162 = sbr.rel (0) target = $region37
    $region36: #{tpu_custom_call.1} parent=1 // pred_region
      %1164 = dma.done [#allocation3], 256
    $region37: #{tpu_custom_call.1} parent=1 // pred_fallthru
      _
    // Predicated region
    $region38: #{tpu_custom_call.1} parent=1 // pred_check
      _
    $region39: #{tpu_custom_call.1} parent=1 // pred_check_branch
      %1166 = sbr.rel (0) target = $region41
    $region40: #{tpu_custom_call.1} parent=1 // pred_region
      %1168 = dma.done [#allocation5], 32
    $region41: #{tpu_custom_call.1} parent=1 // pred_fallthru
      _
    // Predicated region
    $region42: #{tpu_custom_call.1} parent=1 // pred_check
      _
    $region43: #{tpu_custom_call.1} parent=1 // pred_check_branch
      %1170 = sbr.rel (0) target = $region45
    $region44: #{tpu_custom_call.1} parent=1 // pred_region
      %1172 = dma.done [#allocation5], 32
    $region45: #{tpu_custom_call.1} parent=1 // pred_fallthru
      _
    %1173 = vsyncpa [#allocation3], 1
    %1174 = vsyncpa [#allocation5], 1

</llo_original>
